<compile_context>
chip_gen: v5e
topology: v5e:2x2
jax: 0.10.0
libtpu: 0.0.40
codegen_flags: <defaults>
</compile_context>

<pallas_src>
import functools

import jax
import jax.numpy as jnp
from jax import lax
from jax.experimental import pallas as pl
from jax.experimental.pallas import tpu as pltpu

_LANE = 128   # lane (last-dim) tiling
_SUB = 8      # sublane (second-to-last dim) tiling


def _round_up(x, m):
    return (x + m - 1) // m * m


def _pad2d(a, rows, cols):
    r, c = a.shape
    return jnp.pad(a, ((0, rows - r), (0, cols - c)))


def _gaussian_w_eff(W, u, v, n_rows, n_cols):
    """Parameter-only part of one KernelLayer (runs once per call).

    W: (R_p, C_p)  u: (R_p, D_p)  v: (C_p, D_p), all zero padded.
    Returns (w_eff = W * w_hat, sum(w_hat_masked**2)).
    Distance math stays in f32; padded rows/cols of w_hat are masked so the
    regularization sum only covers the true (n_rows, n_cols) region.
    """
    W = W.astype(jnp.float32)
    u = u.astype(jnp.float32)
    v = v.astype(jnp.float32)

    # ||u_i - v_j||^2 = |u_i|^2 + |v_j|^2 - 2 u_i . v_j
    u_sq = jnp.sum(u * u, axis=1, keepdims=True)                     # (R, 1)
    ones_d = jnp.ones((1, v.shape[1]), jnp.float32)
    # (1, C) row of |v_j|^2 off the MXU -- no (C,1)->(1,C) transpose/relayout.
    v_sq = lax.dot_general(ones_d, v * v, (((1,), (1,)), ((), ())),
                           preferred_element_type=jnp.float32)        # (1, C)
    uv = lax.dot_general(u, v, (((1,), (1,)), ((), ())),
                         preferred_element_type=jnp.float32)          # (R, C)
    dist2 = jnp.maximum(u_sq + v_sq - 2.0 * uv, 0.0)
    w_hat = jnp.exp(-dist2)

    row_ok = lax.broadcasted_iota(jnp.int32, w_hat.shape, 0) < n_rows
    col_ok = lax.broadcasted_iota(jnp.int32, w_hat.shape, 1) < n_cols
    w_hat = jnp.where(jnp.logical_and(row_ok, col_ok), w_hat, 0.0)

    return W * w_hat, jnp.sum(w_hat * w_hat)


def _encoder_kernel(x_ref,
                    w1_ref, u1_ref, v1_ref, b1_ref,
                    w2_ref, u2_ref, v2_ref, b2_ref,
                    y_ref, reg_ref,
                    we1_ref, we2_ref,
                    *, n_in, n_hid1, n_hid2, lambda_o, lambda_2):
    """Fused Encoder forward for one batch tile.

    x_ref : (TB, n_in_p)       y_ref : (TB, n_hid2_p)
    wK/uK/vK/bK : padded layer-K parameters (resident across the grid)
    reg_ref : (1, 1) SMEM scalar (combined regularization of both layers)
    weK_ref : VMEM scratch holding W_K * w_hat_K in bf16 (hoisted, reused)
    """
    # ---- parameter-only work: compute once, reuse for every batch tile ----
    @pl.when(pl.program_id(0) == 0)
    def _():
        w_eff1, ss_wh1 = _gaussian_w_eff(w1_ref[...], u1_ref[...], v1_ref[...],
                                         n_in, n_hid1)
        w_eff2, ss_wh2 = _gaussian_w_eff(w2_ref[...], u2_ref[...], v2_ref[...],
                                         n_hid1, n_hid2)
        we1_ref[...] = w_eff1.astype(we1_ref.dtype)
        we2_ref[...] = w_eff2.astype(we2_ref.dtype)

        n1 = float(n_in * n_hid1)
        n2 = float(n_hid1 * n_hid2)
        W1 = w1_ref[...].astype(jnp.float32)   # padded entries are zero
        W2 = w2_ref[...].astype(jnp.float32)
        reg = (lambda_o * (ss_wh1 / n1 + ss_wh2 / n2)
               + lambda_2 * (jnp.sum(W1 * W1) / n1 + jnp.sum(W2 * W2) / n2))
        reg_ref[0, 0] = reg

    # ---- per-batch-tile work: two bf16 MXU matmuls + sigmoids ----
    x = x_ref[...].astype(jnp.bfloat16)
    h1 = jnp.dot(x, we1_ref[...], preferred_element_type=jnp.float32)
    y1 = jax.nn.sigmoid(h1 + b1_ref[...])
    h2 = jnp.dot(y1.astype(jnp.bfloat16), we2_ref[...],
                 preferred_element_type=jnp.float32)
    y_ref[...] = jax.nn.sigmoid(h2 + b2_ref[...])


def encoder_forward(x, params, *, lambda_o, lambda_2):
    """Encoder.forward: fused two-layer kernelized MLP.  Returns (y, total_reg)."""
    p1, p2 = params
    batch, n_in = x.shape
    n_hid1 = p1["W"].shape[1]
    n_hid2 = p2["W"].shape[1]
    n_dim1 = p1["u"].shape[1]
    n_dim2 = p2["u"].shape[1]

    # Pad everything to lane/sublane-aligned tiles (lane-dense output store).
    n_in_p = _round_up(n_in, _LANE)
    n_hid1_p = _round_up(n_hid1, _LANE)
    n_hid2_p = _round_up(n_hid2, _LANE)
    n_dim1_p = _round_up(n_dim1, _LANE)
    n_dim2_p = _round_up(n_dim2, _LANE)

    tb = _LANE if batch >= _LANE else _round_up(batch, _SUB)
    batch_p = _round_up(batch, tb)
    grid = (batch_p // tb,)

    xf = x.astype(jnp.float32)
    x_p = _pad2d(xf, batch_p, n_in_p)
    W1 = _pad2d(p1["W"], n_in_p, n_hid1_p)
    u1 = _pad2d(p1["u"], n_in_p, n_dim1_p)
    v1 = _pad2d(p1["v"], n_hid1_p, n_dim1_p)
    b1 = _pad2d(p1["b"].reshape(1, -1), 1, n_hid1_p)
    W2 = _pad2d(p2["W"], n_hid1_p, n_hid2_p)
    u2 = _pad2d(p2["u"], n_hid1_p, n_dim2_p)
    v2 = _pad2d(p2["v"], n_hid2_p, n_dim2_p)
    b2 = _pad2d(p2["b"].reshape(1, -1), 1, n_hid2_p)

    kern = functools.partial(_encoder_kernel,
                             n_in=n_in, n_hid1=n_hid1, n_hid2=n_hid2,
                             lambda_o=float(lambda_o), lambda_2=float(lambda_2))

    def const(shape):
        return pl.BlockSpec(shape, lambda b: (0, 0))   # resident across batch tiles

    y_pad, reg = pl.pallas_call(
        kern,
        out_shape=(jax.ShapeDtypeStruct((batch_p, n_hid2_p), jnp.float32),
                   jax.ShapeDtypeStruct((1, 1), jnp.float32)),
        grid=grid,
        in_specs=[
            pl.BlockSpec((tb, n_in_p), lambda b: (b, 0)),      # x batch tile
            const((n_in_p, n_hid1_p)), const((n_in_p, n_dim1_p)),
            const((n_hid1_p, n_dim1_p)), const((1, n_hid1_p)),
            const((n_hid1_p, n_hid2_p)), const((n_hid1_p, n_dim2_p)),
            const((n_hid2_p, n_dim2_p)), const((1, n_hid2_p)),
        ],
        out_specs=(
            pl.BlockSpec((tb, n_hid2_p), lambda b: (b, 0)),    # lane-dense y
            pl.BlockSpec((1, 1), lambda b: (0, 0),
                         memory_space=pltpu.MemorySpace.SMEM),  # reg scalar
        ),
        scratch_shapes=[
            pltpu.VMEM((n_in_p, n_hid1_p), jnp.bfloat16),      # W1 * w_hat1
            pltpu.VMEM((n_hid1_p, n_hid2_p), jnp.bfloat16),    # W2 * w_hat2
        ],
        compiler_params=pltpu.CompilerParams(
            # "arbitrary": the w_eff/reg hoist relies on sequential batch
            # tiles seeing the scratch written at tile 0 (megacore-splitting
            # this axis would break that; see TODO above for v7x tiling).
            dimension_semantics=("arbitrary",),
            vmem_limit_bytes=64 * 1024 * 1024,
        ),
    )(x_p, W1, u1, v1, b1, W2, u2, v2, b2)

    return y_pad[:batch, :n_hid2], reg[0, 0]


def init_kernel_layer(key, n_in, n_hid, n_dim):
    """Deterministic synthetic parameter init (small normals, kernelNet-style)."""
    kw, ku, kv, _ = jax.random.split(key, 4)
    W = 1e-3 * jax.random.normal(kw, (n_in, n_hid), jnp.float32)
    u = 1e-3 * jax.random.normal(ku, (n_in, n_dim), jnp.float32)
    v = 1e-3 * jax.random.normal(kv, (n_hid, n_dim), jnp.float32)
    b = jnp.zeros((n_hid,), jnp.float32)
    return dict(W=W, u=u, v=v, b=b)


if __name__ == "__main__":
    # Encoder(n_input, kernel_hidden):
    #   layer1: n_input -> kernel_hidden*2 (n_dim=20)
    #   layer2: kernel_hidden*2 -> kernel_hidden (n_dim=5)
    batch = 2
    n_input = 32
    kernel_hidden = 8
    lambda_o = 0.013
    lambda_2 = 60.0

    root = jax.random.PRNGKey(0)
    kx, k1, k2 = jax.random.split(root, 3)

    x = jax.random.normal(kx, (batch, n_input), jnp.float32)
    params = [
        init_kernel_layer(k1, n_input, kernel_hidden * 2, 20),
        init_kernel_layer(k2, kernel_hidden * 2, kernel_hidden, 5),
    ]

    fwd = jax.jit(functools.partial(encoder_forward,
                                    lambda_o=lambda_o, lambda_2=lambda_2))
    y, total_reg = fwd(x, params)
    jax.block_until_ready((y, total_reg))

    assert y.shape == (batch, kernel_hidden)
    assert total_reg.shape == ()
    assert bool(jnp.all(jnp.isfinite(y)))
    print("KERNEL_OK")
</pallas_src>

<mosaic_0001>
module attributes {stable_mosaic.version = 11 : i64} {
  func.func @_encoder_kernel(%arg0: i32, %arg1: memref<8x128xf32, #tpu.memory_space<vmem>>, %arg2: memref<128x128xf32, #tpu.memory_space<vmem>>, %arg3: memref<128x128xf32, #tpu.memory_space<vmem>>, %arg4: memref<128x128xf32, #tpu.memory_space<vmem>>, %arg5: memref<1x128xf32, #tpu.memory_space<vmem>>, %arg6: memref<128x128xf32, #tpu.memory_space<vmem>>, %arg7: memref<128x128xf32, #tpu.memory_space<vmem>>, %arg8: memref<128x128xf32, #tpu.memory_space<vmem>>, %arg9: memref<1x128xf32, #tpu.memory_space<vmem>>, %arg10: memref<8x128xf32, #tpu.memory_space<vmem>>, %arg11: memref<1x1xf32, #tpu.memory_space<smem>>, %arg12: memref<128x128xbf16, #tpu.memory_space<vmem>>, %arg13: memref<128x128xbf16, #tpu.memory_space<vmem>>) attributes {dimension_semantics = [#tpu.dimension_semantics<arbitrary>], iteration_bounds = array<i64: 1>, scalar_prefetch = 0 : i64, scratch_operands = 2 : i64, tpu.core_type = #tpu.core_type<tc>, window_params = [{transform_indices = @transform_0, window_bounds = array<i64: 8, 128>}, {pipeline_mode = #tpu.pipeline_mode<synchronous>, transform_indices = @transform_1, window_bounds = array<i64: 128, 128>}, {pipeline_mode = #tpu.pipeline_mode<synchronous>, transform_indices = @transform_2, window_bounds = array<i64: 128, 128>}, {pipeline_mode = #tpu.pipeline_mode<synchronous>, transform_indices = @transform_3, window_bounds = array<i64: 128, 128>}, {pipeline_mode = #tpu.pipeline_mode<synchronous>, transform_indices = @transform_4, window_bounds = array<i64: 1, 128>}, {pipeline_mode = #tpu.pipeline_mode<synchronous>, transform_indices = @transform_5, window_bounds = array<i64: 128, 128>}, {pipeline_mode = #tpu.pipeline_mode<synchronous>, transform_indices = @transform_6, window_bounds = array<i64: 128, 128>}, {pipeline_mode = #tpu.pipeline_mode<synchronous>, transform_indices = @transform_7, window_bounds = array<i64: 128, 128>}, {pipeline_mode = #tpu.pipeline_mode<synchronous>, transform_indices = @transform_8, window_bounds = array<i64: 1, 128>}, {transform_indices = @transform_9, window_bounds = array<i64: 8, 128>}, {transform_indices = @transform_10, window_bounds = array<i64: 1, 1>}]} {
    %c0_i32 = arith.constant 0 : i32
    %0 = arith.cmpi eq, %arg0, %c0_i32 : i32
    %1 = arith.extui %0 : i1 to i32
    %c0_i32_0 = arith.constant 0 : i32
    %2 = arith.cmpi ne, %1, %c0_i32_0 : i32
    scf.if %2 {
      %c0_15 = arith.constant 0 : index
      %c0_16 = arith.constant 0 : index
      %27 = vector.load %arg2[%c0_15, %c0_16] : memref<128x128xf32, #tpu.memory_space<vmem>>, vector<128x128xf32>
      %c0_17 = arith.constant 0 : index
      %c0_18 = arith.constant 0 : index
      %28 = vector.load %arg3[%c0_17, %c0_18] : memref<128x128xf32, #tpu.memory_space<vmem>>, vector<128x128xf32>
      %c0_19 = arith.constant 0 : index
      %c0_20 = arith.constant 0 : index
      %29 = vector.load %arg4[%c0_19, %c0_20] : memref<128x128xf32, #tpu.memory_space<vmem>>, vector<128x128xf32>
      %30 = arith.mulf %28, %28 : vector<128x128xf32>
      %cst_21 = arith.constant dense<0.000000e+00> : vector<128xf32>
      %31 = vector.multi_reduction <add>, %30, %cst_21 [1] : vector<128x128xf32> to vector<128xf32>
      %32 = vector.shape_cast %31 : vector<128xf32> to vector<128x1xf32>
      %cst_22 = arith.constant 1.000000e+00 : f32
      %33 = vector.broadcast %cst_22 : f32 to vector<1x128xf32>
      %34 = arith.mulf %29, %29 : vector<128x128xf32>
      %cst_23 = arith.constant dense<0.000000e+00> : vector<1x128xf32>
      %35 = tpu.matmul %33, %34, %cst_23 {dimension_numbers = #tpu.dot_dimension_numbers<[1], [1], [0], [0], [0, 0, 1, 0], [], []>} : vector<1x128xf32>, vector<128x128xf32>, vector<1x128xf32> -> vector<1x128xf32>
      %cst_24 = arith.constant dense<0.000000e+00> : vector<128x128xf32>
      %36 = tpu.matmul %28, %29, %cst_24 {dimension_numbers = #tpu.dot_dimension_numbers<[1], [1], [0], [0], [0, 0, 1, 0], [], []>} : vector<128x128xf32>, vector<128x128xf32>, vector<128x128xf32> -> vector<128x128xf32>
      %37 = vector.broadcast %32 : vector<128x1xf32> to vector<128x128xf32>
      %38 = vector.broadcast %35 : vector<1x128xf32> to vector<128x128xf32>
      %39 = arith.addf %37, %38 : vector<128x128xf32>
      %cst_25 = arith.constant 2.000000e+00 : f32
      %40 = vector.broadcast %cst_25 : f32 to vector<128x128xf32>
      %41 = arith.mulf %40, %36 : vector<128x128xf32>
      %42 = arith.subf %39, %41 : vector<128x128xf32>
      %cst_26 = arith.constant 0.000000e+00 : f32
      %43 = vector.broadcast %cst_26 : f32 to vector<128x128xf32>
      %44 = arith.maximumf %42, %43 : vector<128x128xf32>
      %cst_27 = arith.constant 0.000000e+00 : f32
      %45 = vector.broadcast %cst_27 : f32 to vector<128x128xf32>
      %46 = arith.subf %45, %44 : vector<128x128xf32>
      %47 = math.exp %46 : vector<128x128xf32>
      %48 = tpu.iota {dimensions = array<i32: 0>} : vector<128x128xi32>
      %c32_i32 = arith.constant 32 : i32
      %49 = vector.broadcast %c32_i32 : i32 to vector<128x128xi32>
      %50 = arith.cmpi slt, %48, %49 : vector<128x128xi32>
      %51 = tpu.iota {dimensions = array<i32: 1>} : vector<128x128xi32>
      %c16_i32 = arith.constant 16 : i32
      %52 = vector.broadcast %c16_i32 : i32 to vector<128x128xi32>
      %53 = arith.cmpi slt, %51, %52 : vector<128x128xi32>
      %54 = arith.andi %50, %53 : vector<128x128xi1>
      %cst_28 = arith.constant 0.000000e+00 : f32
      %55 = vector.broadcast %cst_28 : f32 to vector<128x128xf32>
      %56 = arith.select %54, %47, %55 : vector<128x128xi1>, vector<128x128xf32>
      %57 = arith.mulf %27, %56 : vector<128x128xf32>
      %58 = arith.mulf %56, %56 : vector<128x128xf32>
      %59 = vector.shape_cast %58 : vector<128x128xf32> to vector<1x128x128xf32>
      %cst_29 = arith.constant dense<0.000000e+00> : vector<1xf32>
      %60 = vector.multi_reduction <add>, %59, %cst_29 [1, 2] : vector<1x128x128xf32> to vector<1xf32>
      %61 = vector.shape_cast %60 : vector<1xf32> to vector<1x1x1xf32>
      %62 = vector.extract %61[0, 0, 0] : f32 from vector<1x1x1xf32>
      %c0_30 = arith.constant 0 : index
      %c0_31 = arith.constant 0 : index
      %63 = vector.load %arg6[%c0_30, %c0_31] : memref<128x128xf32, #tpu.memory_space<vmem>>, vector<128x128xf32>
      %c0_32 = arith.constant 0 : index
      %c0_33 = arith.constant 0 : index
      %64 = vector.load %arg7[%c0_32, %c0_33] : memref<128x128xf32, #tpu.memory_space<vmem>>, vector<128x128xf32>
      %c0_34 = arith.constant 0 : index
      %c0_35 = arith.constant 0 : index
      %65 = vector.load %arg8[%c0_34, %c0_35] : memref<128x128xf32, #tpu.memory_space<vmem>>, vector<128x128xf32>
      %66 = arith.mulf %64, %64 : vector<128x128xf32>
      %cst_36 = arith.constant dense<0.000000e+00> : vector<128xf32>
      %67 = vector.multi_reduction <add>, %66, %cst_36 [1] : vector<128x128xf32> to vector<128xf32>
      %68 = vector.shape_cast %67 : vector<128xf32> to vector<128x1xf32>
      %cst_37 = arith.constant 1.000000e+00 : f32
      %69 = vector.broadcast %cst_37 : f32 to vector<1x128xf32>
      %70 = arith.mulf %65, %65 : vector<128x128xf32>
      %cst_38 = arith.constant dense<0.000000e+00> : vector<1x128xf32>
      %71 = tpu.matmul %69, %70, %cst_38 {dimension_numbers = #tpu.dot_dimension_numbers<[1], [1], [0], [0], [0, 0, 1, 0], [], []>} : vector<1x128xf32>, vector<128x128xf32>, vector<1x128xf32> -> vector<1x128xf32>
      %cst_39 = arith.constant dense<0.000000e+00> : vector<128x128xf32>
      %72 = tpu.matmul %64, %65, %cst_39 {dimension_numbers = #tpu.dot_dimension_numbers<[1], [1], [0], [0], [0, 0, 1, 0], [], []>} : vector<128x128xf32>, vector<128x128xf32>, vector<128x128xf32> -> vector<128x128xf32>
      %73 = vector.broadcast %68 : vector<128x1xf32> to vector<128x128xf32>
      %74 = vector.broadcast %71 : vector<1x128xf32> to vector<128x128xf32>
      %75 = arith.addf %73, %74 : vector<128x128xf32>
      %cst_40 = arith.constant 2.000000e+00 : f32
      %76 = vector.broadcast %cst_40 : f32 to vector<128x128xf32>
      %77 = arith.mulf %76, %72 : vector<128x128xf32>
      %78 = arith.subf %75, %77 : vector<128x128xf32>
      %cst_41 = arith.constant 0.000000e+00 : f32
      %79 = vector.broadcast %cst_41 : f32 to vector<128x128xf32>
      %80 = arith.maximumf %78, %79 : vector<128x128xf32>
      %cst_42 = arith.constant 0.000000e+00 : f32
      %81 = vector.broadcast %cst_42 : f32 to vector<128x128xf32>
      %82 = arith.subf %81, %80 : vector<128x128xf32>
      %83 = math.exp %82 : vector<128x128xf32>
      %84 = tpu.iota {dimensions = array<i32: 0>} : vector<128x128xi32>
      %c16_i32_43 = arith.constant 16 : i32
      %85 = vector.broadcast %c16_i32_43 : i32 to vector<128x128xi32>
      %86 = arith.cmpi slt, %84, %85 : vector<128x128xi32>
      %87 = tpu.iota {dimensions = array<i32: 1>} : vector<128x128xi32>
      %c8_i32 = arith.constant 8 : i32
      %88 = vector.broadcast %c8_i32 : i32 to vector<128x128xi32>
      %89 = arith.cmpi slt, %87, %88 : vector<128x128xi32>
      %90 = arith.andi %86, %89 : vector<128x128xi1>
      %cst_44 = arith.constant 0.000000e+00 : f32
      %91 = vector.broadcast %cst_44 : f32 to vector<128x128xf32>
      %92 = arith.select %90, %83, %91 : vector<128x128xi1>, vector<128x128xf32>
      %93 = arith.mulf %63, %92 : vector<128x128xf32>
      %94 = arith.mulf %92, %92 : vector<128x128xf32>
      %95 = vector.shape_cast %94 : vector<128x128xf32> to vector<1x128x128xf32>
      %cst_45 = arith.constant dense<0.000000e+00> : vector<1xf32>
      %96 = vector.multi_reduction <add>, %95, %cst_45 [1, 2] : vector<1x128x128xf32> to vector<1xf32>
      %97 = vector.shape_cast %96 : vector<1xf32> to vector<1x1x1xf32>
      %98 = vector.extract %97[0, 0, 0] : f32 from vector<1x1x1xf32>
      %99 = arith.truncf %57 : vector<128x128xf32> to vector<128x128xbf16>
      %c0_46 = arith.constant 0 : index
      %c0_47 = arith.constant 0 : index
      %100 = vector.load %arg12[%c0_46, %c0_47] : memref<128x128xbf16, #tpu.memory_space<vmem>>, vector<128x128xbf16>
      tpu.vector_store %arg12[%c0_46, %c0_47], %99 {strides = array<i32>} : memref<128x128xbf16, #tpu.memory_space<vmem>>, vector<128x128xbf16>,
      %101 = arith.truncf %93 : vector<128x128xf32> to vector<128x128xbf16>
      %c0_48 = arith.constant 0 : index
      %c0_49 = arith.constant 0 : index
      %102 = vector.load %arg13[%c0_48, %c0_49] : memref<128x128xbf16, #tpu.memory_space<vmem>>, vector<128x128xbf16>
      tpu.vector_store %arg13[%c0_48, %c0_49], %101 {strides = array<i32>} : memref<128x128xbf16, #tpu.memory_space<vmem>>, vector<128x128xbf16>,
      %c0_50 = arith.constant 0 : index
      %c0_51 = arith.constant 0 : index
      %103 = vector.load %arg2[%c0_50, %c0_51] : memref<128x128xf32, #tpu.memory_space<vmem>>, vector<128x128xf32>
      %c0_52 = arith.constant 0 : index
      %c0_53 = arith.constant 0 : index
      %104 = vector.load %arg6[%c0_52, %c0_53] : memref<128x128xf32, #tpu.memory_space<vmem>>, vector<128x128xf32>
      %cst_54 = arith.constant 5.120000e+02 : f32
      %105 = arith.divf %62, %cst_54 : f32
      %cst_55 = arith.constant 1.280000e+02 : f32
      %106 = arith.divf %98, %cst_55 : f32
      %107 = arith.addf %105, %106 : f32
      %cst_56 = arith.constant 1.300000e-02 : f32
      %108 = arith.mulf %cst_56, %107 : f32
      %109 = arith.mulf %103, %103 : vector<128x128xf32>
      %110 = vector.shape_cast %109 : vector<128x128xf32> to vector<1x128x128xf32>
      %cst_57 = arith.constant dense<0.000000e+00> : vector<1xf32>
      %111 = vector.multi_reduction <add>, %110, %cst_57 [1, 2] : vector<1x128x128xf32> to vector<1xf32>
      %112 = vector.shape_cast %111 : vector<1xf32> to vector<1x1x1xf32>
      %113 = vector.extract %112[0, 0, 0] : f32 from vector<1x1x1xf32>
      %cst_58 = arith.constant 5.120000e+02 : f32
      %114 = arith.divf %113, %cst_58 : f32
      %115 = arith.mulf %104, %104 : vector<128x128xf32>
      %116 = vector.shape_cast %115 : vector<128x128xf32> to vector<1x128x128xf32>
      %cst_59 = arith.constant dense<0.000000e+00> : vector<1xf32>
      %117 = vector.multi_reduction <add>, %116, %cst_59 [1, 2] : vector<1x128x128xf32> to vector<1xf32>
      %118 = vector.shape_cast %117 : vector<1xf32> to vector<1x1x1xf32>
      %119 = vector.extract %118[0, 0, 0] : f32 from vector<1x1x1xf32>
      %cst_60 = arith.constant 1.280000e+02 : f32
      %120 = arith.divf %119, %cst_60 : f32
      %121 = arith.addf %114, %120 : f32
      %cst_61 = arith.constant 6.000000e+01 : f32
      %122 = arith.mulf %cst_61, %121 : f32
      %123 = arith.addf %108, %122 : f32
      %c0_62 = arith.constant 0 : index
      %c0_63 = arith.constant 0 : index
      %124 = memref.load %arg11[%c0_62, %c0_63] : memref<1x1xf32, #tpu.memory_space<smem>>
      memref.store %123, %arg11[%c0_62, %c0_63] : memref<1x1xf32, #tpu.memory_space<smem>>
    } else {
    }
    %c0 = arith.constant 0 : index
    %c0_1 = arith.constant 0 : index
    %3 = vector.load %arg1[%c0, %c0_1] : memref<8x128xf32, #tpu.memory_space<vmem>>, vector<8x128xf32>
    %4 = arith.truncf %3 : vector<8x128xf32> to vector<8x128xbf16>
    %c0_2 = arith.constant 0 : index
    %c0_3 = arith.constant 0 : index
    %5 = vector.load %arg12[%c0_2, %c0_3] : memref<128x128xbf16, #tpu.memory_space<vmem>>, vector<128x128xbf16>
    %cst = arith.constant dense<0.000000e+00> : vector<8x128xf32>
    %6 = tpu.matmul %4, %5, %cst {dimension_numbers = #tpu.dot_dimension_numbers<[1], [0], [0], [1], [0, 0, 1, 1], [], []>} : vector<8x128xbf16>, vector<128x128xbf16>, vector<8x128xf32> -> vector<8x128xf32>
    %c0_4 = arith.constant 0 : index
    %c0_5 = arith.constant 0 : index
    %7 = vector.load %arg5[%c0_4, %c0_5] : memref<1x128xf32, #tpu.memory_space<vmem>>, vector<1x128xf32>
    %8 = vector.broadcast %7 : vector<1x128xf32> to vector<8x128xf32>
    %9 = arith.addf %6, %8 : vector<8x128xf32>
    %10 = arith.negf %9 : vector<8x128xf32>
    %11 = math.exp %10 : vector<8x128xf32>
    %cst_6 = arith.constant 1.000000e+00 : f32
    %12 = vector.broadcast %cst_6 : f32 to vector<8x128xf32>
    %13 = arith.addf %12, %11 : vector<8x128xf32>
    %14 = arith.divf %12, %13 : vector<8x128xf32>
    %15 = arith.truncf %14 : vector<8x128xf32> to vector<8x128xbf16>
    %c0_7 = arith.constant 0 : index
    %c0_8 = arith.constant 0 : index
    %16 = vector.load %arg13[%c0_7, %c0_8] : memref<128x128xbf16, #tpu.memory_space<vmem>>, vector<128x128xbf16>
    %cst_9 = arith.constant dense<0.000000e+00> : vector<8x128xf32>
    %17 = tpu.matmul %15, %16, %cst_9 {dimension_numbers = #tpu.dot_dimension_numbers<[1], [0], [0], [1], [0, 0, 1, 1], [], []>} : vector<8x128xbf16>, vector<128x128xbf16>, vector<8x128xf32> -> vector<8x128xf32>
    %c0_10 = arith.constant 0 : index
    %c0_11 = arith.constant 0 : index
    %18 = vector.load %arg9[%c0_10, %c0_11] : memref<1x128xf32, #tpu.memory_space<vmem>>, vector<1x128xf32>
    %19 = vector.broadcast %18 : vector<1x128xf32> to vector<8x128xf32>
    %20 = arith.addf %17, %19 : vector<8x128xf32>
    %21 = arith.negf %20 : vector<8x128xf32>
    %22 = math.exp %21 : vector<8x128xf32>
    %cst_12 = arith.constant 1.000000e+00 : f32
    %23 = vector.broadcast %cst_12 : f32 to vector<8x128xf32>
    %24 = arith.addf %23, %22 : vector<8x128xf32>
    %25 = arith.divf %23, %24 : vector<8x128xf32>
    %c0_13 = arith.constant 0 : index
    %c0_14 = arith.constant 0 : index
    %26 = vector.load %arg10[%c0_13, %c0_14] : memref<8x128xf32, #tpu.memory_space<vmem>>, vector<8x128xf32>
    tpu.vector_store %arg10[%c0_13, %c0_14], %25 {strides = array<i32>} : memref<8x128xf32, #tpu.memory_space<vmem>>, vector<8x128xf32>,
    return
  }
  func.func @transform_0(%arg0: i32) -> (i32, i32) {
    %c0_i32 = arith.constant 0 : i32
    %c0_i32_0 = arith.constant 0 : i32
    return %arg0, %c0_i32 : i32, i32
  }
  func.func @transform_1(%arg0: i32) -> (i32, i32) {
    %c0_i32 = arith.constant 0 : i32
    %c0_i32_0 = arith.constant 0 : i32
    %c0_i32_1 = arith.constant 0 : i32
    return %c0_i32, %c0_i32_0 : i32, i32
  }
  func.func @transform_2(%arg0: i32) -> (i32, i32) {
    %c0_i32 = arith.constant 0 : i32
    %c0_i32_0 = arith.constant 0 : i32
    %c0_i32_1 = arith.constant 0 : i32
    return %c0_i32, %c0_i32_0 : i32, i32
  }
  func.func @transform_3(%arg0: i32) -> (i32, i32) {
    %c0_i32 = arith.constant 0 : i32
    %c0_i32_0 = arith.constant 0 : i32
    %c0_i32_1 = arith.constant 0 : i32
    return %c0_i32, %c0_i32_0 : i32, i32
  }
  func.func @transform_4(%arg0: i32) -> (i32, i32) {
    %c0_i32 = arith.constant 0 : i32
    %c0_i32_0 = arith.constant 0 : i32
    %c0_i32_1 = arith.constant 0 : i32
    return %c0_i32, %c0_i32_0 : i32, i32
  }
  func.func @transform_5(%arg0: i32) -> (i32, i32) {
    %c0_i32 = arith.constant 0 : i32
    %c0_i32_0 = arith.constant 0 : i32
    %c0_i32_1 = arith.constant 0 : i32
    return %c0_i32, %c0_i32_0 : i32, i32
  }
  func.func @transform_6(%arg0: i32) -> (i32, i32) {
    %c0_i32 = arith.constant 0 : i32
    %c0_i32_0 = arith.constant 0 : i32
    %c0_i32_1 = arith.constant 0 : i32
    return %c0_i32, %c0_i32_0 : i32, i32
  }
  func.func @transform_7(%arg0: i32) -> (i32, i32) {
    %c0_i32 = arith.constant 0 : i32
    %c0_i32_0 = arith.constant 0 : i32
    %c0_i32_1 = arith.constant 0 : i32
    return %c0_i32, %c0_i32_0 : i32, i32
  }
  func.func @transform_8(%arg0: i32) -> (i32, i32) {
    %c0_i32 = arith.constant 0 : i32
    %c0_i32_0 = arith.constant 0 : i32
    %c0_i32_1 = arith.constant 0 : i32
    return %c0_i32, %c0_i32_0 : i32, i32
  }
  func.func @transform_9(%arg0: i32) -> (i32, i32) {
    %c0_i32 = arith.constant 0 : i32
    %c0_i32_0 = arith.constant 0 : i32
    return %arg0, %c0_i32 : i32, i32
  }
  func.func @transform_10(%arg0: i32) -> (i32, i32) {
    %c0_i32 = arith.constant 0 : i32
    %c0_i32_0 = arith.constant 0 : i32
    %c0_i32_1 = arith.constant 0 : i32
    return %c0_i32, %c0_i32_0 : i32, i32
  }
}

</mosaic_0001>

<llo_original>
// kernel: encoder_forward.1
$region0: #{encoder_forward.1}
  #allocation0 [shape = 'u32[]', space=smem, size = 0x4, offset = 0x4, fixed_abs, tag = 'smem constant byte address 0x4 - core index']
  #allocation1 [shape = 'u32[72,128]{1,0:T(1,128)}', space=vmem, size = 0x9000, scoped, tag = 'internal scratch']
  #allocation2 [shape = 'bf16[128,128]{1,0:T(8,128)(2,1)}', space=vmem, size = 0x8000, scoped, tag = 'scratch operand']
  #allocation3 [shape = 'bf16[128,128]{1,0:T(8,128)(2,1)}', space=vmem, size = 0x8000, scoped, tag = 'scratch operand']
  %s0 = inlined_call_operand.vmem [shape: f32[8,128], index: 0, kind: input, shape index: {}]
  %s1 = inlined_call_operand.vmem [shape: f32[128,128], index: 1, kind: input, shape index: {}]
  %s2 = inlined_call_operand.vmem [shape: f32[128,128], index: 2, kind: input, shape index: {}]
  %s3 = inlined_call_operand.vmem [shape: f32[128,128], index: 3, kind: input, shape index: {}]
  %s4 = inlined_call_operand.vmem [shape: f32[1,128], index: 4, kind: input, shape index: {}]
  %s5 = inlined_call_operand.vmem [shape: f32[128,128], index: 5, kind: input, shape index: {}]
  %s6 = inlined_call_operand.vmem [shape: f32[128,128], index: 6, kind: input, shape index: {}]
  %s7 = inlined_call_operand.vmem [shape: f32[128,128], index: 7, kind: input, shape index: {}]
  %s8 = inlined_call_operand.vmem [shape: f32[1,128], index: 8, kind: input, shape index: {}]
  %s9 = inlined_call_operand.vmem [shape: f32[8,128], index: 9, kind: output, shape index: {0}]
  %s10 = inlined_call_operand.hbm [shape: f32[1,1], index: 10, kind: output, shape index: {1}]
  %11 = xla_tuple %s9, %s10
  %s12 = sld [smem:[#allocation0]]
  $region58: #{encoder_forward.1} parent=0
    _
  %s14 = ssub.s32 1, %s12
  %s15 = scalar_select 0, %s14, %s12
  $region1: #{encoder_forward.1} parent=0
    #allocation4 [shape = 'u8[512]{0}', space=smem, size = 0x200, scoped, tag = 'output window, operand 1, single buffered']
    #allocation5 [shape = 's32[1]{0}', space=sflag, size = 0x4, scoped, tag = 'scoped memory for encoder_forward.1']
    %16 = vsyncpa [#allocation5], 0
    // Predicated region
    $region2: #{encoder_forward.1} parent=1 // pred_check
      _
    $region3: #{encoder_forward.1} parent=1 // pred_check_branch
      %18 = sbr.rel (0) target = $region5
    $region4: #{encoder_forward.1} parent=1 // pred_region
      _
    $region5: #{encoder_forward.1} parent=1 // pred_fallthru
      _
    // Predicated region
    $region6: #{encoder_forward.1} parent=1 // pred_check
      _
    $region7: #{encoder_forward.1} parent=1 // pred_check_branch
      %20 = sbr.rel (0) target = $region9
    $region8: #{encoder_forward.1} parent=1 // pred_region
      _
    $region9: #{encoder_forward.1} parent=1 // pred_fallthru
      _
    // Predicated region
    $region10: #{encoder_forward.1} parent=1 // pred_check
      _
    $region11: #{encoder_forward.1} parent=1 // pred_check_branch
      %22 = sbr.rel (0) target = $region13
    $region12: #{encoder_forward.1} parent=1 // pred_region
      _
    $region13: #{encoder_forward.1} parent=1 // pred_fallthru
      _
    // Predicated region
    $region14: #{encoder_forward.1} parent=1 // pred_check
      _
    $region15: #{encoder_forward.1} parent=1 // pred_check_branch
      %24 = sbr.rel (0) target = $region17
    $region16: #{encoder_forward.1} parent=1 // pred_region
      _
    $region17: #{encoder_forward.1} parent=1 // pred_fallthru
      _
    // Predicated region
    $region18: #{encoder_forward.1} parent=1 // pred_check
      _
    $region19: #{encoder_forward.1} parent=1 // pred_check_branch
      %26 = sbr.rel (0) target = $region21
    $region20: #{encoder_forward.1} parent=1 // pred_region
      _
    $region21: #{encoder_forward.1} parent=1 // pred_fallthru
      _
    // Predicated region
    $region22: #{encoder_forward.1} parent=1 // pred_check
      _
    $region23: #{encoder_forward.1} parent=1 // pred_check_branch
      %28 = sbr.rel (0) target = $region25
    $region24: #{encoder_forward.1} parent=1 // pred_region
      _
    $region25: #{encoder_forward.1} parent=1 // pred_fallthru
      _
    // Predicated region
    $region26: #{encoder_forward.1} parent=1 // pred_check
      _
    $region27: #{encoder_forward.1} parent=1 // pred_check_branch
      %30 = sbr.rel (0) target = $region29
    $region28: #{encoder_forward.1} parent=1 // pred_region
      _
    $region29: #{encoder_forward.1} parent=1 // pred_fallthru
      _
    // Predicated region
    $region30: #{encoder_forward.1} parent=1 // pred_check
      _
    $region31: #{encoder_forward.1} parent=1 // pred_check_branch
      %32 = sbr.rel (0) target = $region33
    $region32: #{encoder_forward.1} parent=1 // pred_region
      _
    $region33: #{encoder_forward.1} parent=1 // pred_fallthru
      _
    // Predicated region
    $region34: #{encoder_forward.1} parent=1 // pred_check
      _
    $region35: #{encoder_forward.1} parent=1 // pred_check_branch
      %34 = sbr.rel (0) target = $region37
    $region36: #{encoder_forward.1} parent=1 // pred_region
      _
    $region37: #{encoder_forward.1} parent=1 // pred_fallthru
      _
    %p35 = scmp.eq.s32.totalorder 0, 0
    // Predicated region
    $region38: #{encoder_forward.1} parent=1 // pred_check
      %p36 = pneg %p35
    $region39: #{encoder_forward.1} parent=1 // pred_check_branch
      %38 = sbr.rel (%p36) target = $region41
    $region40: #{encoder_forward.1} parent=1 // pred_region
      %v39 = vld [vmem:[%s1] sm:$0xff]
      %v40 = vld [vmem:[%s1 + $0x8] sm:$0xff]
      %v41 = vld [vmem:[%s1 + $0x10] sm:$0xff]
      %v42 = vld [vmem:[%s1 + $0x18] sm:$0xff]
      %v43 = vld [vmem:[%s1 + $0x20] sm:$0xff]
      %v44 = vld [vmem:[%s1 + $0x28] sm:$0xff]
      %v45 = vld [vmem:[%s1 + $0x30] sm:$0xff]
      %v46 = vld [vmem:[%s1 + $0x38] sm:$0xff]
      %v47 = vld [vmem:[%s1 + $0x40] sm:$0xff]
      %v48 = vld [vmem:[%s1 + $0x48] sm:$0xff]
      %v49 = vld [vmem:[%s1 + $0x50] sm:$0xff]
      %v50 = vld [vmem:[%s1 + $0x58] sm:$0xff]
      %v51 = vld [vmem:[%s1 + $0x60] sm:$0xff]
      %v52 = vld [vmem:[%s1 + $0x68] sm:$0xff]
      %v53 = vld [vmem:[%s1 + $0x70] sm:$0xff]
      %v54 = vld [vmem:[%s1 + $0x78] sm:$0xff]
      %v55 = vld [vmem:[%s2] sm:$0xff]
      %v56 = vld [vmem:[%s2 + $0x8] sm:$0xff]
      %v57 = vld [vmem:[%s2 + $0x10] sm:$0xff]
      %v58 = vld [vmem:[%s2 + $0x18] sm:$0xff]
      %v59 = vld [vmem:[%s2 + $0x20] sm:$0xff]
      %v60 = vld [vmem:[%s2 + $0x28] sm:$0xff]
      %v61 = vld [vmem:[%s2 + $0x30] sm:$0xff]
      %v62 = vld [vmem:[%s2 + $0x38] sm:$0xff]
      %v63 = vld [vmem:[%s2 + $0x40] sm:$0xff]
      %v64 = vld [vmem:[%s2 + $0x48] sm:$0xff]
      %v65 = vld [vmem:[%s2 + $0x50] sm:$0xff]
      %v66 = vld [vmem:[%s2 + $0x58] sm:$0xff]
      %v67 = vld [vmem:[%s2 + $0x60] sm:$0xff]
      %v68 = vld [vmem:[%s2 + $0x68] sm:$0xff]
      %v69 = vld [vmem:[%s2 + $0x70] sm:$0xff]
      %v70 = vld [vmem:[%s2 + $0x78] sm:$0xff]
      %v71 = vld [vmem:[%s3] sm:$0xff]
      %v72 = vld [vmem:[%s3 + $0x8] sm:$0xff]
      %v73 = vld [vmem:[%s3 + $0x10] sm:$0xff]
      %v74 = vld [vmem:[%s3 + $0x18] sm:$0xff]
      %v75 = vld [vmem:[%s3 + $0x20] sm:$0xff]
      %v76 = vld [vmem:[%s3 + $0x28] sm:$0xff]
      %v77 = vld [vmem:[%s3 + $0x30] sm:$0xff]
      %v78 = vld [vmem:[%s3 + $0x38] sm:$0xff]
      %v79 = vld [vmem:[%s3 + $0x40] sm:$0xff]
      %v80 = vld [vmem:[%s3 + $0x48] sm:$0xff]
      %v81 = vld [vmem:[%s3 + $0x50] sm:$0xff]
      %v82 = vld [vmem:[%s3 + $0x58] sm:$0xff]
      %v83 = vld [vmem:[%s3 + $0x60] sm:$0xff]
      %v84 = vld [vmem:[%s3 + $0x68] sm:$0xff]
      %v85 = vld [vmem:[%s3 + $0x70] sm:$0xff]
      %v86 = vld [vmem:[%s3 + $0x78] sm:$0xff]
      %v87 = vmul.f32 %v55, %v55
      %v88 = vmul.f32 %v56, %v56
      %v89 = vmul.f32 %v57, %v57
      %v90 = vmul.f32 %v58, %v58
      %v91 = vmul.f32 %v59, %v59
      %v92 = vmul.f32 %v60, %v60
      %v93 = vmul.f32 %v61, %v61
      %v94 = vmul.f32 %v62, %v62
      %v95 = vmul.f32 %v63, %v63
      %v96 = vmul.f32 %v64, %v64
      %v97 = vmul.f32 %v65, %v65
      %v98 = vmul.f32 %v66, %v66
      %v99 = vmul.f32 %v67, %v67
      %v100 = vmul.f32 %v68, %v68
      %v101 = vmul.f32 %v69, %v69
      %v102 = vmul.f32 %v70, %v70
      %103 = vadd.xlane.f32.xlu0 %v87
      %v104 = vpop.xlane.xlu0 %103
      %105 = vadd.xlane.f32.xlu0 %v88
      %v106 = vpop.xlane.xlu0 %105
      %107 = vadd.xlane.f32.xlu0 %v89
      %v108 = vpop.xlane.xlu0 %107
      %109 = vadd.xlane.f32.xlu0 %v90
      %v110 = vpop.xlane.xlu0 %109
      %111 = vadd.xlane.f32.xlu0 %v91
      %v112 = vpop.xlane.xlu0 %111
      %113 = vadd.xlane.f32.xlu0 %v92
      %v114 = vpop.xlane.xlu0 %113
      %115 = vadd.xlane.f32.xlu0 %v93
      %v116 = vpop.xlane.xlu0 %115
      %117 = vadd.xlane.f32.xlu0 %v94
      %v118 = vpop.xlane.xlu0 %117
      %119 = vadd.xlane.f32.xlu0 %v95
      %v120 = vpop.xlane.xlu0 %119
      %121 = vadd.xlane.f32.xlu0 %v96
      %v122 = vpop.xlane.xlu0 %121
      %123 = vadd.xlane.f32.xlu0 %v97
      %v124 = vpop.xlane.xlu0 %123
      %125 = vadd.xlane.f32.xlu0 %v98
      %v126 = vpop.xlane.xlu0 %125
      %127 = vadd.xlane.f32.xlu0 %v99
      %v128 = vpop.xlane.xlu0 %127
      %129 = vadd.xlane.f32.xlu0 %v100
      %v130 = vpop.xlane.xlu0 %129
      %131 = vadd.xlane.f32.xlu0 %v101
      %v132 = vpop.xlane.xlu0 %131
      %133 = vadd.xlane.f32.xlu0 %v102
      %v134 = vpop.xlane.xlu0 %133
      %v135 = vmul.f32 %v71, %v71
      %v136 = vmul.f32 %v72, %v72
      %v137 = vmul.f32 %v73, %v73
      %v138 = vmul.f32 %v74, %v74
      %v139 = vmul.f32 %v75, %v75
      %v140 = vmul.f32 %v76, %v76
      %v141 = vmul.f32 %v77, %v77
      %v142 = vmul.f32 %v78, %v78
      %v143 = vmul.f32 %v79, %v79
      %v144 = vmul.f32 %v80, %v80
      %v145 = vmul.f32 %v81, %v81
      %v146 = vmul.f32 %v82, %v82
      %v147 = vmul.f32 %v83, %v83
      %v148 = vmul.f32 %v84, %v84
      %v149 = vmul.f32 %v85, %v85
      %v150 = vmul.f32 %v86, %v86
      %151 = vmatpush.xpose.msra.mxu0 %v150
      %152 = vmatpush.xpose.msra.mxu0 %v149
      %153 = vmatpush.xpose.msra.mxu0 %v148
      %154 = vmatpush.xpose.msra.mxu0 %v147
      %155 = vmatpush.xpose.msra.mxu0 %v146
      %156 = vmatpush.xpose.msra.mxu0 %v145
      %157 = vmatpush.xpose.msra.mxu0 %v144
      %158 = vmatpush.xpose.msra.mxu0 %v143
      %159 = vmatpush.xpose.msra.mxu0 %v142
      %160 = vmatpush.xpose.msra.mxu0 %v141
      %161 = vmatpush.xpose.msra.mxu0 %v140
      %162 = vmatpush.xpose.msra.mxu0 %v139
      %163 = vmatpush.xpose.msra.mxu0 %v138
      %164 = vmatpush.xpose.msra.mxu0 %v137
      %165 = vmatpush.xpose.msra.mxu0 %v136
      %166 = vmatpush.xpose.msra.mxu0 %v135
      %167 = vmatmul.f32.gmra.mxu0 1.0
      %v168 = vpop.f32.mrf.mxu0
      %v169 = vadd.f32 0.0, %v168
      %170 = vdwg.mxu0
      %171 = vmatpush.xpose.msra.mxu0 %v86
      %172 = vmatpush.xpose.msra.mxu0 %v85
      %173 = vmatpush.xpose.msra.mxu0 %v84
      %174 = vmatpush.xpose.msra.mxu0 %v83
      %175 = vmatpush.xpose.msra.mxu0 %v82
      %176 = vmatpush.xpose.msra.mxu0 %v81
      %177 = vmatpush.xpose.msra.mxu0 %v80
      %178 = vmatpush.xpose.msra.mxu0 %v79
      %179 = vmatpush.xpose.msra.mxu0 %v78
      %180 = vmatpush.xpose.msra.mxu0 %v77
      %181 = vmatpush.xpose.msra.mxu0 %v76
      %182 = vmatpush.xpose.msra.mxu0 %v75
      %183 = vmatpush.xpose.msra.mxu0 %v74
      %184 = vmatpush.xpose.msra.mxu0 %v73
      %185 = vmatpush.xpose.msra.mxu0 %v72
      %186 = vmatpush.xpose.msra.mxu0 %v71
      %187 = vmatmul.f32.gmra.mxu0 %v55
      %v188 = vpop.f32.mrf.mxu0
      %v189 = vadd.f32 0.0, %v188
      %190 = vmatmul.f32.gmra.mxu0 %v56
      %v191 = vpop.f32.mrf.mxu0
      %v192 = vadd.f32 0.0, %v191
      %193 = vmatmul.f32.gmra.mxu0 %v57
      %v194 = vpop.f32.mrf.mxu0
      %v195 = vadd.f32 0.0, %v194
      %196 = vmatmul.f32.gmra.mxu0 %v58
      %v197 = vpop.f32.mrf.mxu0
      %v198 = vadd.f32 0.0, %v197
      %199 = vmatmul.f32.gmra.mxu0 %v59
      %v200 = vpop.f32.mrf.mxu0
      %v201 = vadd.f32 0.0, %v200
      %202 = vmatmul.f32.gmra.mxu0 %v60
      %v203 = vpop.f32.mrf.mxu0
      %v204 = vadd.f32 0.0, %v203
      %205 = vmatmul.f32.gmra.mxu0 %v61
      %v206 = vpop.f32.mrf.mxu0
      %v207 = vadd.f32 0.0, %v206
      %208 = vmatmul.f32.gmra.mxu0 %v62
      %v209 = vpop.f32.mrf.mxu0
      %v210 = vadd.f32 0.0, %v209
      %211 = vmatmul.f32.gmra.mxu0 %v63
      %v212 = vpop.f32.mrf.mxu0
      %v213 = vadd.f32 0.0, %v212
      %214 = vmatmul.f32.gmra.mxu0 %v64
      %v215 = vpop.f32.mrf.mxu0
      %v216 = vadd.f32 0.0, %v215
      %217 = vmatmul.f32.gmra.mxu0 %v65
      %v218 = vpop.f32.mrf.mxu0
      %v219 = vadd.f32 0.0, %v218
      %220 = vmatmul.f32.gmra.mxu0 %v66
      %v221 = vpop.f32.mrf.mxu0
      %v222 = vadd.f32 0.0, %v221
      %223 = vmatmul.f32.gmra.mxu0 %v67
      %v224 = vpop.f32.mrf.mxu0
      %v225 = vadd.f32 0.0, %v224
      %226 = vmatmul.f32.gmra.mxu0 %v68
      %v227 = vpop.f32.mrf.mxu0
      %v228 = vadd.f32 0.0, %v227
      %229 = vmatmul.f32.gmra.mxu0 %v69
      %v230 = vpop.f32.mrf.mxu0
      %v231 = vadd.f32 0.0, %v230
      %232 = vmatmul.f32.gmra.mxu0 %v70
      %v233 = vpop.f32.mrf.mxu0
      %v234 = vadd.f32 0.0, %v233
      %235 = vdwg.mxu0
      %v236 = vperm.slane %v169, 0
      %v237 = vadd.f32 %v104, %v236
      %v238 = vadd.f32 %v106, %v236
      %v239 = vadd.f32 %v108, %v236
      %v240 = vadd.f32 %v110, %v236
      %v241 = vadd.f32 %v112, %v236
      %v242 = vadd.f32 %v114, %v236
      %v243 = vadd.f32 %v116, %v236
      %v244 = vadd.f32 %v118, %v236
      %v245 = vadd.f32 %v120, %v236
      %v246 = vadd.f32 %v122, %v236
      %v247 = vadd.f32 %v124, %v236
      %v248 = vadd.f32 %v126, %v236
      %v249 = vadd.f32 %v128, %v236
      %v250 = vadd.f32 %v130, %v236
      %v251 = vadd.f32 %v132, %v236
      %v252 = vadd.f32 %v134, %v236
      %v253 = vmul.f32 %v189, 2.0
      %v254 = vmul.f32 %v192, 2.0
      %v255 = vmul.f32 %v195, 2.0
      %v256 = vmul.f32 %v198, 2.0
      %v257 = vmul.f32 %v201, 2.0
      %v258 = vmul.f32 %v204, 2.0
      %v259 = vmul.f32 %v207, 2.0
      %v260 = vmul.f32 %v210, 2.0
      %v261 = vmul.f32 %v213, 2.0
      %v262 = vmul.f32 %v216, 2.0
      %v263 = vmul.f32 %v219, 2.0
      %v264 = vmul.f32 %v222, 2.0
      %v265 = vmul.f32 %v225, 2.0
      %v266 = vmul.f32 %v228, 2.0
      %v267 = vmul.f32 %v231, 2.0
      %v268 = vmul.f32 %v234, 2.0
      %v269 = vsub.f32 %v237, %v253
      %v270 = vsub.f32 %v238, %v254
      %v271 = vsub.f32 %v239, %v255
      %v272 = vsub.f32 %v240, %v256
      %v273 = vsub.f32 %v241, %v257
      %v274 = vsub.f32 %v242, %v258
      %v275 = vsub.f32 %v243, %v259
      %v276 = vsub.f32 %v244, %v260
      %v277 = vsub.f32 %v245, %v261
      %v278 = vsub.f32 %v246, %v262
      %v279 = vsub.f32 %v247, %v263
      %v280 = vsub.f32 %v248, %v264
      %v281 = vsub.f32 %v249, %v265
      %v282 = vsub.f32 %v250, %v266
      %v283 = vsub.f32 %v251, %v267
      %v284 = vsub.f32 %v252, %v268
      %v285 = vmax.f32 %v269, 0.0
      %v286 = vmax.f32 %v270, 0.0
      %v287 = vmax.f32 %v271, 0.0
      %v288 = vmax.f32 %v272, 0.0
      %v289 = vmax.f32 %v273, 0.0
      %v290 = vmax.f32 %v274, 0.0
      %v291 = vmax.f32 %v275, 0.0
      %v292 = vmax.f32 %v276, 0.0
      %v293 = vmax.f32 %v277, 0.0
      %v294 = vmax.f32 %v278, 0.0
      %v295 = vmax.f32 %v279, 0.0
      %v296 = vmax.f32 %v280, 0.0
      %v297 = vmax.f32 %v281, 0.0
      %v298 = vmax.f32 %v282, 0.0
      %v299 = vmax.f32 %v283, 0.0
      %v300 = vmax.f32 %v284, 0.0
      %v301 = vsub.f32 0.0, %v285
      %v302 = vsub.f32 0.0, %v286
      %v303 = vsub.f32 0.0, %v287
      %v304 = vsub.f32 0.0, %v288
      %v305 = vsub.f32 0.0, %v289
      %v306 = vsub.f32 0.0, %v290
      %v307 = vsub.f32 0.0, %v291
      %v308 = vsub.f32 0.0, %v292
      %v309 = vsub.f32 0.0, %v293
      %v310 = vsub.f32 0.0, %v294
      %v311 = vsub.f32 0.0, %v295
      %v312 = vsub.f32 0.0, %v296
      %v313 = vsub.f32 0.0, %v297
      %v314 = vsub.f32 0.0, %v298
      %v315 = vsub.f32 0.0, %v299
      %v316 = vsub.f32 0.0, %v300
      %v317 = vmul.f32 %v301, 1.442695
      %v318 = vpow.pop %v317
      %v319 = vmul.f32 %v302, 1.442695
      %v320 = vpow.pop %v319
      %v321 = vmul.f32 %v303, 1.442695
      %v322 = vpow.pop %v321
      %v323 = vmul.f32 %v304, 1.442695
      %v324 = vpow.pop %v323
      %v325 = vmul.f32 %v305, 1.442695
      %v326 = vpow.pop %v325
      %v327 = vmul.f32 %v306, 1.442695
      %v328 = vpow.pop %v327
      %v329 = vmul.f32 %v307, 1.442695
      %v330 = vpow.pop %v329
      %v331 = vmul.f32 %v308, 1.442695
      %v332 = vpow.pop %v331
      %v333 = vmul.f32 %v309, 1.442695
      %v334 = vpow.pop %v333
      %v335 = vmul.f32 %v310, 1.442695
      %v336 = vpow.pop %v335
      %v337 = vmul.f32 %v311, 1.442695
      %v338 = vpow.pop %v337
      %v339 = vmul.f32 %v312, 1.442695
      %v340 = vpow.pop %v339
      %v341 = vmul.f32 %v313, 1.442695
      %v342 = vpow.pop %v341
      %v343 = vmul.f32 %v314, 1.442695
      %v344 = vpow.pop %v343
      %v345 = vmul.f32 %v315, 1.442695
      %v346 = vpow.pop %v345
      %v347 = vmul.f32 %v316, 1.442695
      %v348 = vpow.pop %v347
      %v349 = vlaneseq
      %v350 = vshrl.u32 %v349, 7
      %v351 = vadd.s32 %v350, 8
      %v352 = vadd.s32 %v350, 16
      %v353 = vadd.s32 %v350, 24
      %v354 = vadd.s32 %v350, 32
      %v355 = vadd.s32 %v350, 40
      %v356 = vadd.s32 %v350, 48
      %v357 = vadd.s32 %v350, 56
      %v358 = vadd.s32 %v350, 64
      %v359 = vadd.s32 %v350, 72
      %v360 = vadd.s32 %v350, 80
      %v361 = vadd.s32 %v350, 88
      %v362 = vadd.s32 %v350, 96
      %v363 = vadd.s32 %v350, 104
      %v364 = vadd.s32 %v350, 112
      %v365 = vadd.s32 %v350, 120
      %vm366 = vcmp.lt.s32.totalorder %v350, 32
      %vm367 = vcmp.lt.s32.totalorder %v351, 32
      %vm368 = vcmp.lt.s32.totalorder %v352, 32
      %vm369 = vcmp.lt.s32.totalorder %v353, 32
      %vm370 = vcmp.lt.s32.totalorder %v354, 32
      %vm371 = vcmp.lt.s32.totalorder %v355, 32
      %vm372 = vcmp.lt.s32.totalorder %v356, 32
      %vm373 = vcmp.lt.s32.totalorder %v357, 32
      %vm374 = vcmp.lt.s32.totalorder %v358, 32
      %vm375 = vcmp.lt.s32.totalorder %v359, 32
      %vm376 = vcmp.lt.s32.totalorder %v360, 32
      %vm377 = vcmp.lt.s32.totalorder %v361, 32
      %vm378 = vcmp.lt.s32.totalorder %v362, 32
      %vm379 = vcmp.lt.s32.totalorder %v363, 32
      %vm380 = vcmp.lt.s32.totalorder %v364, 32
      %vm381 = vcmp.lt.s32.totalorder %v365, 32
      %v382 = vlaneseq
      %v383 = vand.u32 %v382, 127
      %vm384 = vcmp.lt.s32.totalorder %v383, 16
      %vm385 = vmand %vm366, %vm384
      %vm386 = vmand %vm367, %vm384
      %vm387 = vmand %vm368, %vm384
      %vm388 = vmand %vm369, %vm384
      %vm389 = vmand %vm370, %vm384
      %vm390 = vmand %vm371, %vm384
      %vm391 = vmand %vm372, %vm384
      %vm392 = vmand %vm373, %vm384
      %vm393 = vmand %vm374, %vm384
      %vm394 = vmand %vm375, %vm384
      %vm395 = vmand %vm376, %vm384
      %vm396 = vmand %vm377, %vm384
      %vm397 = vmand %vm378, %vm384
      %vm398 = vmand %vm379, %vm384
      %vm399 = vmand %vm380, %vm384
      %vm400 = vmand %vm381, %vm384
      %v401 = vsel %vm385, %v318, 0.0
      %v402 = vsel %vm386, %v320, 0.0
      %v403 = vsel %vm387, %v322, 0.0
      %v404 = vsel %vm388, %v324, 0.0
      %v405 = vsel %vm389, %v326, 0.0
      %v406 = vsel %vm390, %v328, 0.0
      %v407 = vsel %vm391, %v330, 0.0
      %v408 = vsel %vm392, %v332, 0.0
      %v409 = vsel %vm393, %v334, 0.0
      %v410 = vsel %vm394, %v336, 0.0
      %v411 = vsel %vm395, %v338, 0.0
      %v412 = vsel %vm396, %v340, 0.0
      %v413 = vsel %vm397, %v342, 0.0
      %v414 = vsel %vm398, %v344, 0.0
      %v415 = vsel %vm399, %v346, 0.0
      %v416 = vsel %vm400, %v348, 0.0
      %v417 = vmul.f32 %v39, %v401
      %v418 = vmul.f32 %v40, %v402
      %v419 = vmul.f32 %v41, %v403
      %v420 = vmul.f32 %v42, %v404
      %v421 = vmul.f32 %v43, %v405
      %v422 = vmul.f32 %v44, %v406
      %v423 = vmul.f32 %v45, %v407
      %v424 = vmul.f32 %v46, %v408
      %v425 = vmul.f32 %v47, %v409
      %v426 = vmul.f32 %v48, %v410
      %v427 = vmul.f32 %v49, %v411
      %v428 = vmul.f32 %v50, %v412
      %v429 = vmul.f32 %v51, %v413
      %v430 = vmul.f32 %v52, %v414
      %v431 = vmul.f32 %v53, %v415
      %v432 = vmul.f32 %v54, %v416
      %v433 = vmul.f32 %v401, %v401
      %v434 = vmul.f32 %v402, %v402
      %v435 = vmul.f32 %v403, %v403
      %v436 = vmul.f32 %v404, %v404
      %v437 = vmul.f32 %v405, %v405
      %v438 = vmul.f32 %v406, %v406
      %v439 = vmul.f32 %v407, %v407
      %v440 = vmul.f32 %v408, %v408
      %v441 = vmul.f32 %v409, %v409
      %v442 = vmul.f32 %v410, %v410
      %v443 = vmul.f32 %v411, %v411
      %v444 = vmul.f32 %v412, %v412
      %v445 = vmul.f32 %v413, %v413
      %v446 = vmul.f32 %v414, %v414
      %v447 = vmul.f32 %v415, %v415
      %v448 = vmul.f32 %v416, %v416
      %v449 = vadd.f32 %v433, %v434
      %v450 = vadd.f32 %v449, %v435
      %v451 = vadd.f32 %v450, %v436
      %v452 = vadd.f32 %v451, %v437
      %v453 = vadd.f32 %v452, %v438
      %v454 = vadd.f32 %v453, %v439
      %v455 = vadd.f32 %v454, %v440
      %v456 = vadd.f32 %v455, %v441
      %v457 = vadd.f32 %v456, %v442
      %v458 = vadd.f32 %v457, %v443
      %v459 = vadd.f32 %v458, %v444
      %v460 = vadd.f32 %v459, %v445
      %v461 = vadd.f32 %v460, %v446
      %v462 = vadd.f32 %v461, %v447
      %v463 = vadd.f32 %v462, %v448
      %464 = vadd.xlane.f32.xlu0 %v463
      %v465 = vpop.xlane.xlu0 %464
      %v466 = vrot.slane %v465, 4
      %v467 = vadd.f32 %v465, %v466
      %v468 = vrot.slane %v467, 2
      %v469 = vadd.f32 %v467, %v468
      %v470 = vrot.slane %v469, 1
      %v471 = vadd.f32 %v469, %v470
      %s472 = vtos %v471
      %v473 = vld [vmem:[%s5] sm:$0xff]
      %v474 = vld [vmem:[%s5 + $0x8] sm:$0xff]
      %v475 = vld [vmem:[%s5 + $0x10] sm:$0xff]
      %v476 = vld [vmem:[%s5 + $0x18] sm:$0xff]
      %v477 = vld [vmem:[%s5 + $0x20] sm:$0xff]
      %v478 = vld [vmem:[%s5 + $0x28] sm:$0xff]
      %v479 = vld [vmem:[%s5 + $0x30] sm:$0xff]
      %v480 = vld [vmem:[%s5 + $0x38] sm:$0xff]
      %v481 = vld [vmem:[%s5 + $0x40] sm:$0xff]
      %v482 = vld [vmem:[%s5 + $0x48] sm:$0xff]
      %v483 = vld [vmem:[%s5 + $0x50] sm:$0xff]
      %v484 = vld [vmem:[%s5 + $0x58] sm:$0xff]
      %v485 = vld [vmem:[%s5 + $0x60] sm:$0xff]
      %v486 = vld [vmem:[%s5 + $0x68] sm:$0xff]
      %v487 = vld [vmem:[%s5 + $0x70] sm:$0xff]
      %v488 = vld [vmem:[%s5 + $0x78] sm:$0xff]
      %v489 = vld [vmem:[%s6] sm:$0xff]
      %v490 = vld [vmem:[%s6 + $0x8] sm:$0xff]
      %v491 = vld [vmem:[%s6 + $0x10] sm:$0xff]
      %v492 = vld [vmem:[%s6 + $0x18] sm:$0xff]
      %v493 = vld [vmem:[%s6 + $0x20] sm:$0xff]
      %v494 = vld [vmem:[%s6 + $0x28] sm:$0xff]
      %v495 = vld [vmem:[%s6 + $0x30] sm:$0xff]
      %v496 = vld [vmem:[%s6 + $0x38] sm:$0xff]
      %v497 = vld [vmem:[%s6 + $0x40] sm:$0xff]
      %v498 = vld [vmem:[%s6 + $0x48] sm:$0xff]
      %v499 = vld [vmem:[%s6 + $0x50] sm:$0xff]
      %v500 = vld [vmem:[%s6 + $0x58] sm:$0xff]
      %v501 = vld [vmem:[%s6 + $0x60] sm:$0xff]
      %v502 = vld [vmem:[%s6 + $0x68] sm:$0xff]
      %v503 = vld [vmem:[%s6 + $0x70] sm:$0xff]
      %v504 = vld [vmem:[%s6 + $0x78] sm:$0xff]
      %v505 = vld [vmem:[%s7] sm:$0xff]
      %v506 = vld [vmem:[%s7 + $0x8] sm:$0xff]
      %v507 = vld [vmem:[%s7 + $0x10] sm:$0xff]
      %v508 = vld [vmem:[%s7 + $0x18] sm:$0xff]
      %v509 = vld [vmem:[%s7 + $0x20] sm:$0xff]
      %v510 = vld [vmem:[%s7 + $0x28] sm:$0xff]
      %v511 = vld [vmem:[%s7 + $0x30] sm:$0xff]
      %v512 = vld [vmem:[%s7 + $0x38] sm:$0xff]
      %v513 = vld [vmem:[%s7 + $0x40] sm:$0xff]
      %v514 = vld [vmem:[%s7 + $0x48] sm:$0xff]
      %v515 = vld [vmem:[%s7 + $0x50] sm:$0xff]
      %v516 = vld [vmem:[%s7 + $0x58] sm:$0xff]
      %v517 = vld [vmem:[%s7 + $0x60] sm:$0xff]
      %v518 = vld [vmem:[%s7 + $0x68] sm:$0xff]
      %v519 = vld [vmem:[%s7 + $0x70] sm:$0xff]
      %v520 = vld [vmem:[%s7 + $0x78] sm:$0xff]
      %v521 = vmul.f32 %v489, %v489
      %v522 = vmul.f32 %v490, %v490
      %v523 = vmul.f32 %v491, %v491
      %v524 = vmul.f32 %v492, %v492
      %v525 = vmul.f32 %v493, %v493
      %v526 = vmul.f32 %v494, %v494
      %v527 = vmul.f32 %v495, %v495
      %v528 = vmul.f32 %v496, %v496
      %v529 = vmul.f32 %v497, %v497
      %v530 = vmul.f32 %v498, %v498
      %v531 = vmul.f32 %v499, %v499
      %v532 = vmul.f32 %v500, %v500
      %v533 = vmul.f32 %v501, %v501
      %v534 = vmul.f32 %v502, %v502
      %v535 = vmul.f32 %v503, %v503
      %v536 = vmul.f32 %v504, %v504
      %537 = vadd.xlane.f32.xlu0 %v521
      %v538 = vpop.xlane.xlu0 %537
      %539 = vadd.xlane.f32.xlu0 %v522
      %v540 = vpop.xlane.xlu0 %539
      %541 = vadd.xlane.f32.xlu0 %v523
      %v542 = vpop.xlane.xlu0 %541
      %543 = vadd.xlane.f32.xlu0 %v524
      %v544 = vpop.xlane.xlu0 %543
      %545 = vadd.xlane.f32.xlu0 %v525
      %v546 = vpop.xlane.xlu0 %545
      %547 = vadd.xlane.f32.xlu0 %v526
      %v548 = vpop.xlane.xlu0 %547
      %549 = vadd.xlane.f32.xlu0 %v527
      %v550 = vpop.xlane.xlu0 %549
      %551 = vadd.xlane.f32.xlu0 %v528
      %v552 = vpop.xlane.xlu0 %551
      %553 = vadd.xlane.f32.xlu0 %v529
      %v554 = vpop.xlane.xlu0 %553
      %555 = vadd.xlane.f32.xlu0 %v530
      %v556 = vpop.xlane.xlu0 %555
      %557 = vadd.xlane.f32.xlu0 %v531
      %v558 = vpop.xlane.xlu0 %557
      %559 = vadd.xlane.f32.xlu0 %v532
      %v560 = vpop.xlane.xlu0 %559
      %561 = vadd.xlane.f32.xlu0 %v533
      %v562 = vpop.xlane.xlu0 %561
      %563 = vadd.xlane.f32.xlu0 %v534
      %v564 = vpop.xlane.xlu0 %563
      %565 = vadd.xlane.f32.xlu0 %v535
      %v566 = vpop.xlane.xlu0 %565
      %567 = vadd.xlane.f32.xlu0 %v536
      %v568 = vpop.xlane.xlu0 %567
      %v569 = vmul.f32 %v505, %v505
      %v570 = vmul.f32 %v506, %v506
      %v571 = vmul.f32 %v507, %v507
      %v572 = vmul.f32 %v508, %v508
      %v573 = vmul.f32 %v509, %v509
      %v574 = vmul.f32 %v510, %v510
      %v575 = vmul.f32 %v511, %v511
      %v576 = vmul.f32 %v512, %v512
      %v577 = vmul.f32 %v513, %v513
      %v578 = vmul.f32 %v514, %v514
      %v579 = vmul.f32 %v515, %v515
      %v580 = vmul.f32 %v516, %v516
      %v581 = vmul.f32 %v517, %v517
      %v582 = vmul.f32 %v518, %v518
      %v583 = vmul.f32 %v519, %v519
      %v584 = vmul.f32 %v520, %v520
      %585 = vmatpush.xpose.msra.mxu0 %v584
      %586 = vmatpush.xpose.msra.mxu0 %v583
      %587 = vmatpush.xpose.msra.mxu0 %v582
      %588 = vmatpush.xpose.msra.mxu0 %v581
      %589 = vmatpush.xpose.msra.mxu0 %v580
      %590 = vmatpush.xpose.msra.mxu0 %v579
      %591 = vmatpush.xpose.msra.mxu0 %v578
      %592 = vmatpush.xpose.msra.mxu0 %v577
      %593 = vmatpush.xpose.msra.mxu0 %v576
      %594 = vmatpush.xpose.msra.mxu0 %v575
      %595 = vmatpush.xpose.msra.mxu0 %v574
      %596 = vmatpush.xpose.msra.mxu0 %v573
      %597 = vmatpush.xpose.msra.mxu0 %v572
      %598 = vmatpush.xpose.msra.mxu0 %v571
      %599 = vmatpush.xpose.msra.mxu0 %v570
      %600 = vmatpush.xpose.msra.mxu0 %v569
      %601 = vmatmul.f32.gmra.mxu0 1.0
      %v602 = vpop.f32.mrf.mxu0
      %v603 = vadd.f32 0.0, %v602
      %604 = vdwg.mxu0
      %605 = vmatpush.xpose.msra.mxu0 %v520
      %606 = vmatpush.xpose.msra.mxu0 %v519
      %607 = vmatpush.xpose.msra.mxu0 %v518
      %608 = vmatpush.xpose.msra.mxu0 %v517
      %609 = vmatpush.xpose.msra.mxu0 %v516
      %610 = vmatpush.xpose.msra.mxu0 %v515
      %611 = vmatpush.xpose.msra.mxu0 %v514
      %612 = vmatpush.xpose.msra.mxu0 %v513
      %613 = vmatpush.xpose.msra.mxu0 %v512
      %614 = vmatpush.xpose.msra.mxu0 %v511
      %615 = vmatpush.xpose.msra.mxu0 %v510
      %616 = vmatpush.xpose.msra.mxu0 %v509
      %617 = vmatpush.xpose.msra.mxu0 %v508
      %618 = vmatpush.xpose.msra.mxu0 %v507
      %619 = vmatpush.xpose.msra.mxu0 %v506
      %620 = vmatpush.xpose.msra.mxu0 %v505
      %621 = vmatmul.f32.gmra.mxu0 %v489
      %v622 = vpop.f32.mrf.mxu0
      %v623 = vadd.f32 0.0, %v622
      %624 = vmatmul.f32.gmra.mxu0 %v490
      %v625 = vpop.f32.mrf.mxu0
      %v626 = vadd.f32 0.0, %v625
      %627 = vmatmul.f32.gmra.mxu0 %v491
      %v628 = vpop.f32.mrf.mxu0
      %v629 = vadd.f32 0.0, %v628
      %630 = vmatmul.f32.gmra.mxu0 %v492
      %v631 = vpop.f32.mrf.mxu0
      %v632 = vadd.f32 0.0, %v631
      %633 = vmatmul.f32.gmra.mxu0 %v493
      %v634 = vpop.f32.mrf.mxu0
      %v635 = vadd.f32 0.0, %v634
      %636 = vmatmul.f32.gmra.mxu0 %v494
      %v637 = vpop.f32.mrf.mxu0
      %v638 = vadd.f32 0.0, %v637
      %639 = vmatmul.f32.gmra.mxu0 %v495
      %v640 = vpop.f32.mrf.mxu0
      %v641 = vadd.f32 0.0, %v640
      %642 = vmatmul.f32.gmra.mxu0 %v496
      %v643 = vpop.f32.mrf.mxu0
      %v644 = vadd.f32 0.0, %v643
      %645 = vmatmul.f32.gmra.mxu0 %v497
      %v646 = vpop.f32.mrf.mxu0
      %v647 = vadd.f32 0.0, %v646
      %648 = vmatmul.f32.gmra.mxu0 %v498
      %v649 = vpop.f32.mrf.mxu0
      %v650 = vadd.f32 0.0, %v649
      %651 = vmatmul.f32.gmra.mxu0 %v499
      %v652 = vpop.f32.mrf.mxu0
      %v653 = vadd.f32 0.0, %v652
      %654 = vmatmul.f32.gmra.mxu0 %v500
      %v655 = vpop.f32.mrf.mxu0
      %v656 = vadd.f32 0.0, %v655
      %657 = vmatmul.f32.gmra.mxu0 %v501
      %v658 = vpop.f32.mrf.mxu0
      %v659 = vadd.f32 0.0, %v658
      %660 = vmatmul.f32.gmra.mxu0 %v502
      %v661 = vpop.f32.mrf.mxu0
      %v662 = vadd.f32 0.0, %v661
      %663 = vmatmul.f32.gmra.mxu0 %v503
      %v664 = vpop.f32.mrf.mxu0
      %v665 = vadd.f32 0.0, %v664
      %666 = vmatmul.f32.gmra.mxu0 %v504
      %v667 = vpop.f32.mrf.mxu0
      %v668 = vadd.f32 0.0, %v667
      %669 = vdwg.mxu0
      %v670 = vperm.slane %v603, 0
      %v671 = vadd.f32 %v538, %v670
      %v672 = vadd.f32 %v540, %v670
      %v673 = vadd.f32 %v542, %v670
      %v674 = vadd.f32 %v544, %v670
      %v675 = vadd.f32 %v546, %v670
      %v676 = vadd.f32 %v548, %v670
      %v677 = vadd.f32 %v550, %v670
      %v678 = vadd.f32 %v552, %v670
      %v679 = vadd.f32 %v554, %v670
      %v680 = vadd.f32 %v556, %v670
      %v681 = vadd.f32 %v558, %v670
      %v682 = vadd.f32 %v560, %v670
      %v683 = vadd.f32 %v562, %v670
      %v684 = vadd.f32 %v564, %v670
      %v685 = vadd.f32 %v566, %v670
      %v686 = vadd.f32 %v568, %v670
      %v687 = vmul.f32 %v623, 2.0
      %v688 = vmul.f32 %v626, 2.0
      %v689 = vmul.f32 %v629, 2.0
      %v690 = vmul.f32 %v632, 2.0
      %v691 = vmul.f32 %v635, 2.0
      %v692 = vmul.f32 %v638, 2.0
      %v693 = vmul.f32 %v641, 2.0
      %v694 = vmul.f32 %v644, 2.0
      %v695 = vmul.f32 %v647, 2.0
      %v696 = vmul.f32 %v650, 2.0
      %v697 = vmul.f32 %v653, 2.0
      %v698 = vmul.f32 %v656, 2.0
      %v699 = vmul.f32 %v659, 2.0
      %v700 = vmul.f32 %v662, 2.0
      %v701 = vmul.f32 %v665, 2.0
      %v702 = vmul.f32 %v668, 2.0
      %v703 = vsub.f32 %v671, %v687
      %v704 = vsub.f32 %v672, %v688
      %v705 = vsub.f32 %v673, %v689
      %v706 = vsub.f32 %v674, %v690
      %v707 = vsub.f32 %v675, %v691
      %v708 = vsub.f32 %v676, %v692
      %v709 = vsub.f32 %v677, %v693
      %v710 = vsub.f32 %v678, %v694
      %v711 = vsub.f32 %v679, %v695
      %v712 = vsub.f32 %v680, %v696
      %v713 = vsub.f32 %v681, %v697
      %v714 = vsub.f32 %v682, %v698
      %v715 = vsub.f32 %v683, %v699
      %v716 = vsub.f32 %v684, %v700
      %v717 = vsub.f32 %v685, %v701
      %v718 = vsub.f32 %v686, %v702
      %v719 = vmax.f32 %v703, 0.0
      %v720 = vmax.f32 %v704, 0.0
      %v721 = vmax.f32 %v705, 0.0
      %v722 = vmax.f32 %v706, 0.0
      %v723 = vmax.f32 %v707, 0.0
      %v724 = vmax.f32 %v708, 0.0
      %v725 = vmax.f32 %v709, 0.0
      %v726 = vmax.f32 %v710, 0.0
      %v727 = vmax.f32 %v711, 0.0
      %v728 = vmax.f32 %v712, 0.0
      %v729 = vmax.f32 %v713, 0.0
      %v730 = vmax.f32 %v714, 0.0
      %v731 = vmax.f32 %v715, 0.0
      %v732 = vmax.f32 %v716, 0.0
      %v733 = vmax.f32 %v717, 0.0
      %v734 = vmax.f32 %v718, 0.0
      %v735 = vsub.f32 0.0, %v719
      %v736 = vsub.f32 0.0, %v720
      %v737 = vsub.f32 0.0, %v721
      %v738 = vsub.f32 0.0, %v722
      %v739 = vsub.f32 0.0, %v723
      %v740 = vsub.f32 0.0, %v724
      %v741 = vsub.f32 0.0, %v725
      %v742 = vsub.f32 0.0, %v726
      %v743 = vsub.f32 0.0, %v727
      %v744 = vsub.f32 0.0, %v728
      %v745 = vsub.f32 0.0, %v729
      %v746 = vsub.f32 0.0, %v730
      %v747 = vsub.f32 0.0, %v731
      %v748 = vsub.f32 0.0, %v732
      %v749 = vsub.f32 0.0, %v733
      %v750 = vsub.f32 0.0, %v734
      %v751 = vmul.f32 %v735, 1.442695
      %v752 = vpow.pop %v751
      %v753 = vmul.f32 %v736, 1.442695
      %v754 = vpow.pop %v753
      %v755 = vmul.f32 %v737, 1.442695
      %v756 = vpow.pop %v755
      %v757 = vmul.f32 %v738, 1.442695
      %v758 = vpow.pop %v757
      %v759 = vmul.f32 %v739, 1.442695
      %v760 = vpow.pop %v759
      %v761 = vmul.f32 %v740, 1.442695
      %v762 = vpow.pop %v761
      %v763 = vmul.f32 %v741, 1.442695
      %v764 = vpow.pop %v763
      %v765 = vmul.f32 %v742, 1.442695
      %v766 = vpow.pop %v765
      %v767 = vmul.f32 %v743, 1.442695
      %v768 = vpow.pop %v767
      %v769 = vmul.f32 %v744, 1.442695
      %v770 = vpow.pop %v769
      %v771 = vmul.f32 %v745, 1.442695
      %v772 = vpow.pop %v771
      %v773 = vmul.f32 %v746, 1.442695
      %v774 = vpow.pop %v773
      %v775 = vmul.f32 %v747, 1.442695
      %v776 = vpow.pop %v775
      %v777 = vmul.f32 %v748, 1.442695
      %v778 = vpow.pop %v777
      %v779 = vmul.f32 %v749, 1.442695
      %v780 = vpow.pop %v779
      %v781 = vmul.f32 %v750, 1.442695
      %v782 = vpow.pop %v781
      %vm783 = vcmp.lt.s32.totalorder %v350, 16
      %vm784 = vcmp.lt.s32.totalorder %v351, 16
      %vm785 = vcmp.lt.s32.totalorder %v352, 16
      %vm786 = vcmp.lt.s32.totalorder %v353, 16
      %vm787 = vcmp.lt.s32.totalorder %v354, 16
      %vm788 = vcmp.lt.s32.totalorder %v355, 16
      %vm789 = vcmp.lt.s32.totalorder %v356, 16
      %vm790 = vcmp.lt.s32.totalorder %v357, 16
      %vm791 = vcmp.lt.s32.totalorder %v358, 16
      %vm792 = vcmp.lt.s32.totalorder %v359, 16
      %vm793 = vcmp.lt.s32.totalorder %v360, 16
      %vm794 = vcmp.lt.s32.totalorder %v361, 16
      %vm795 = vcmp.lt.s32.totalorder %v362, 16
      %vm796 = vcmp.lt.s32.totalorder %v363, 16
      %vm797 = vcmp.lt.s32.totalorder %v364, 16
      %vm798 = vcmp.lt.s32.totalorder %v365, 16
      %vm799 = vcmp.lt.s32.totalorder %v383, 8
      %vm800 = vmand %vm783, %vm799
      %vm801 = vmand %vm784, %vm799
      %vm802 = vmand %vm785, %vm799
      %vm803 = vmand %vm786, %vm799
      %vm804 = vmand %vm787, %vm799
      %vm805 = vmand %vm788, %vm799
      %vm806 = vmand %vm789, %vm799
      %vm807 = vmand %vm790, %vm799
      %vm808 = vmand %vm791, %vm799
      %vm809 = vmand %vm792, %vm799
      %vm810 = vmand %vm793, %vm799
      %vm811 = vmand %vm794, %vm799
      %vm812 = vmand %vm795, %vm799
      %vm813 = vmand %vm796, %vm799
      %vm814 = vmand %vm797, %vm799
      %vm815 = vmand %vm798, %vm799
      %v816 = vsel %vm800, %v752, 0.0
      %v817 = vsel %vm801, %v754, 0.0
      %v818 = vsel %vm802, %v756, 0.0
      %v819 = vsel %vm803, %v758, 0.0
      %v820 = vsel %vm804, %v760, 0.0
      %v821 = vsel %vm805, %v762, 0.0
      %v822 = vsel %vm806, %v764, 0.0
      %v823 = vsel %vm807, %v766, 0.0
      %v824 = vsel %vm808, %v768, 0.0
      %v825 = vsel %vm809, %v770, 0.0
      %v826 = vsel %vm810, %v772, 0.0
      %v827 = vsel %vm811, %v774, 0.0
      %v828 = vsel %vm812, %v776, 0.0
      %v829 = vsel %vm813, %v778, 0.0
      %v830 = vsel %vm814, %v780, 0.0
      %v831 = vsel %vm815, %v782, 0.0
      %v832 = vmul.f32 %v473, %v816
      %v833 = vmul.f32 %v474, %v817
      %v834 = vmul.f32 %v475, %v818
      %v835 = vmul.f32 %v476, %v819
      %v836 = vmul.f32 %v477, %v820
      %v837 = vmul.f32 %v478, %v821
      %v838 = vmul.f32 %v479, %v822
      %v839 = vmul.f32 %v480, %v823
      %v840 = vmul.f32 %v481, %v824
      %v841 = vmul.f32 %v482, %v825
      %v842 = vmul.f32 %v483, %v826
      %v843 = vmul.f32 %v484, %v827
      %v844 = vmul.f32 %v485, %v828
      %v845 = vmul.f32 %v486, %v829
      %v846 = vmul.f32 %v487, %v830
      %v847 = vmul.f32 %v488, %v831
      %v848 = vmul.f32 %v816, %v816
      %v849 = vmul.f32 %v817, %v817
      %v850 = vmul.f32 %v818, %v818
      %v851 = vmul.f32 %v819, %v819
      %v852 = vmul.f32 %v820, %v820
      %v853 = vmul.f32 %v821, %v821
      %v854 = vmul.f32 %v822, %v822
      %v855 = vmul.f32 %v823, %v823
      %v856 = vmul.f32 %v824, %v824
      %v857 = vmul.f32 %v825, %v825
      %v858 = vmul.f32 %v826, %v826
      %v859 = vmul.f32 %v827, %v827
      %v860 = vmul.f32 %v828, %v828
      %v861 = vmul.f32 %v829, %v829
      %v862 = vmul.f32 %v830, %v830
      %v863 = vmul.f32 %v831, %v831
      %v864 = vadd.f32 %v848, %v849
      %v865 = vadd.f32 %v864, %v850
      %v866 = vadd.f32 %v865, %v851
      %v867 = vadd.f32 %v866, %v852
      %v868 = vadd.f32 %v867, %v853
      %v869 = vadd.f32 %v868, %v854
      %v870 = vadd.f32 %v869, %v855
      %v871 = vadd.f32 %v870, %v856
      %v872 = vadd.f32 %v871, %v857
      %v873 = vadd.f32 %v872, %v858
      %v874 = vadd.f32 %v873, %v859
      %v875 = vadd.f32 %v874, %v860
      %v876 = vadd.f32 %v875, %v861
      %v877 = vadd.f32 %v876, %v862
      %v878 = vadd.f32 %v877, %v863
      %879 = vadd.xlane.f32.xlu0 %v878
      %v880 = vpop.xlane.xlu0 %879
      %v881 = vrot.slane %v880, 4
      %v882 = vadd.f32 %v880, %v881
      %v883 = vrot.slane %v882, 2
      %v884 = vadd.f32 %v882, %v883
      %v885 = vrot.slane %v884, 1
      %v886 = vadd.f32 %v884, %v885
      %s887 = vtos %v886
      %v888 = vpack.c.bf16 %v417, %v417
      %v889 = vpack.c.bf16 %v418, %v418
      %v890 = vpack.c.bf16 %v419, %v419
      %v891 = vpack.c.bf16 %v420, %v420
      %v892 = vpack.c.bf16 %v421, %v421
      %v893 = vpack.c.bf16 %v422, %v422
      %v894 = vpack.c.bf16 %v423, %v423
      %v895 = vpack.c.bf16 %v424, %v424
      %v896 = vpack.c.bf16 %v425, %v425
      %v897 = vpack.c.bf16 %v426, %v426
      %v898 = vpack.c.bf16 %v427, %v427
      %v899 = vpack.c.bf16 %v428, %v428
      %v900 = vpack.c.bf16 %v429, %v429
      %v901 = vpack.c.bf16 %v430, %v430
      %v902 = vpack.c.bf16 %v431, %v431
      %v903 = vpack.c.bf16 %v432, %v432
      %904 = vst [vmem:[#allocation2] sm:$0xf] %v888
      %905 = vst [vmem:[#allocation2 + $0x4] sm:$0xf] %v889
      %906 = vst [vmem:[#allocation2 + $0x8] sm:$0xf] %v890
      %907 = vst [vmem:[#allocation2 + $0xc] sm:$0xf] %v891
      %908 = vst [vmem:[#allocation2 + $0x10] sm:$0xf] %v892
      %909 = vst [vmem:[#allocation2 + $0x14] sm:$0xf] %v893
      %910 = vst [vmem:[#allocation2 + $0x18] sm:$0xf] %v894
      %911 = vst [vmem:[#allocation2 + $0x1c] sm:$0xf] %v895
      %912 = vst [vmem:[#allocation2 + $0x20] sm:$0xf] %v896
      %913 = vst [vmem:[#allocation2 + $0x24] sm:$0xf] %v897
      %914 = vst [vmem:[#allocation2 + $0x28] sm:$0xf] %v898
      %915 = vst [vmem:[#allocation2 + $0x2c] sm:$0xf] %v899
      %916 = vst [vmem:[#allocation2 + $0x30] sm:$0xf] %v900
      %917 = vst [vmem:[#allocation2 + $0x34] sm:$0xf] %v901
      %918 = vst [vmem:[#allocation2 + $0x38] sm:$0xf] %v902
      %919 = vst [vmem:[#allocation2 + $0x3c] sm:$0xf] %v903
      %v920 = vpack.c.bf16 %v832, %v832
      %v921 = vpack.c.bf16 %v833, %v833
      %v922 = vpack.c.bf16 %v834, %v834
      %v923 = vpack.c.bf16 %v835, %v835
      %v924 = vpack.c.bf16 %v836, %v836
      %v925 = vpack.c.bf16 %v837, %v837
      %v926 = vpack.c.bf16 %v838, %v838
      %v927 = vpack.c.bf16 %v839, %v839
      %v928 = vpack.c.bf16 %v840, %v840
      %v929 = vpack.c.bf16 %v841, %v841
      %v930 = vpack.c.bf16 %v842, %v842
      %v931 = vpack.c.bf16 %v843, %v843
      %v932 = vpack.c.bf16 %v844, %v844
      %v933 = vpack.c.bf16 %v845, %v845
      %v934 = vpack.c.bf16 %v846, %v846
      %v935 = vpack.c.bf16 %v847, %v847
      %936 = vst [vmem:[#allocation3] sm:$0xf] %v920
      %937 = vst [vmem:[#allocation3 + $0x4] sm:$0xf] %v921
      %938 = vst [vmem:[#allocation3 + $0x8] sm:$0xf] %v922
      %939 = vst [vmem:[#allocation3 + $0xc] sm:$0xf] %v923
      %940 = vst [vmem:[#allocation3 + $0x10] sm:$0xf] %v924
      %941 = vst [vmem:[#allocation3 + $0x14] sm:$0xf] %v925
      %942 = vst [vmem:[#allocation3 + $0x18] sm:$0xf] %v926
      %943 = vst [vmem:[#allocation3 + $0x1c] sm:$0xf] %v927
      %944 = vst [vmem:[#allocation3 + $0x20] sm:$0xf] %v928
      %945 = vst [vmem:[#allocation3 + $0x24] sm:$0xf] %v929
      %946 = vst [vmem:[#allocation3 + $0x28] sm:$0xf] %v930
      %947 = vst [vmem:[#allocation3 + $0x2c] sm:$0xf] %v931
      %948 = vst [vmem:[#allocation3 + $0x30] sm:$0xf] %v932
      %949 = vst [vmem:[#allocation3 + $0x34] sm:$0xf] %v933
      %950 = vst [vmem:[#allocation3 + $0x38] sm:$0xf] %v934
      %951 = vst [vmem:[#allocation3 + $0x3c] sm:$0xf] %v935
      %v952 = vld [vmem:[%s1] sm:$0xff]
      %v953 = vld [vmem:[%s1 + $0x8] sm:$0xff]
      %v954 = vld [vmem:[%s1 + $0x10] sm:$0xff]
      %v955 = vld [vmem:[%s1 + $0x18] sm:$0xff]
      %v956 = vld [vmem:[%s1 + $0x20] sm:$0xff]
      %v957 = vld [vmem:[%s1 + $0x28] sm:$0xff]
      %v958 = vld [vmem:[%s1 + $0x30] sm:$0xff]
      %v959 = vld [vmem:[%s1 + $0x38] sm:$0xff]
      %v960 = vld [vmem:[%s1 + $0x40] sm:$0xff]
      %v961 = vld [vmem:[%s1 + $0x48] sm:$0xff]
      %v962 = vld [vmem:[%s1 + $0x50] sm:$0xff]
      %v963 = vld [vmem:[%s1 + $0x58] sm:$0xff]
      %v964 = vld [vmem:[%s1 + $0x60] sm:$0xff]
      %v965 = vld [vmem:[%s1 + $0x68] sm:$0xff]
      %v966 = vld [vmem:[%s1 + $0x70] sm:$0xff]
      %v967 = vld [vmem:[%s1 + $0x78] sm:$0xff]
      %v968 = vld [vmem:[%s5] sm:$0xff]
      %v969 = vld [vmem:[%s5 + $0x8] sm:$0xff]
      %v970 = vld [vmem:[%s5 + $0x10] sm:$0xff]
      %v971 = vld [vmem:[%s5 + $0x18] sm:$0xff]
      %v972 = vld [vmem:[%s5 + $0x20] sm:$0xff]
      %v973 = vld [vmem:[%s5 + $0x28] sm:$0xff]
      %v974 = vld [vmem:[%s5 + $0x30] sm:$0xff]
      %v975 = vld [vmem:[%s5 + $0x38] sm:$0xff]
      %v976 = vld [vmem:[%s5 + $0x40] sm:$0xff]
      %v977 = vld [vmem:[%s5 + $0x48] sm:$0xff]
      %v978 = vld [vmem:[%s5 + $0x50] sm:$0xff]
      %v979 = vld [vmem:[%s5 + $0x58] sm:$0xff]
      %v980 = vld [vmem:[%s5 + $0x60] sm:$0xff]
      %v981 = vld [vmem:[%s5 + $0x68] sm:$0xff]
      %v982 = vld [vmem:[%s5 + $0x70] sm:$0xff]
      %v983 = vld [vmem:[%s5 + $0x78] sm:$0xff]
      %v984 = vrcp.pop 512.0
      %v985 = vmul.f32 512.0, %v984
      %v986 = vsub.f32 1.0, %v985
      %v987 = vmul.f32 %v984, %v986
      %v988 = vadd.f32 %v984, %v987
      %vm989 = vweird.f32 %v984
      %v990 = vsel %vm989, %v984, %v988
      %s991 = vtos %v990
      %s992 = smul.f32 %s472, %s991
      %v993 = vrcp.pop 128.0
      %v994 = vmul.f32 128.0, %v993
      %v995 = vsub.f32 1.0, %v994
      %v996 = vmul.f32 %v993, %v995
      %v997 = vadd.f32 %v993, %v996
      %vm998 = vweird.f32 %v993
      %v999 = vsel %vm998, %v993, %v997
      %s1000 = vtos %v999
      %s1001 = smul.f32 %s887, %s1000
      %s1002 = sadd.f32 %s992, %s1001
      %s1003 = smul.f32 %s1002, 0.013
      %v1004 = vmul.f32 %v952, %v952
      %v1005 = vmul.f32 %v953, %v953
      %v1006 = vmul.f32 %v954, %v954
      %v1007 = vmul.f32 %v955, %v955
      %v1008 = vmul.f32 %v956, %v956
      %v1009 = vmul.f32 %v957, %v957
      %v1010 = vmul.f32 %v958, %v958
      %v1011 = vmul.f32 %v959, %v959
      %v1012 = vmul.f32 %v960, %v960
      %v1013 = vmul.f32 %v961, %v961
      %v1014 = vmul.f32 %v962, %v962
      %v1015 = vmul.f32 %v963, %v963
      %v1016 = vmul.f32 %v964, %v964
      %v1017 = vmul.f32 %v965, %v965
      %v1018 = vmul.f32 %v966, %v966
      %v1019 = vmul.f32 %v967, %v967
      %v1020 = vadd.f32 %v1004, %v1005
      %v1021 = vadd.f32 %v1020, %v1006
      %v1022 = vadd.f32 %v1021, %v1007
      %v1023 = vadd.f32 %v1022, %v1008
      %v1024 = vadd.f32 %v1023, %v1009
      %v1025 = vadd.f32 %v1024, %v1010
      %v1026 = vadd.f32 %v1025, %v1011
      %v1027 = vadd.f32 %v1026, %v1012
      %v1028 = vadd.f32 %v1027, %v1013
      %v1029 = vadd.f32 %v1028, %v1014
      %v1030 = vadd.f32 %v1029, %v1015
      %v1031 = vadd.f32 %v1030, %v1016
      %v1032 = vadd.f32 %v1031, %v1017
      %v1033 = vadd.f32 %v1032, %v1018
      %v1034 = vadd.f32 %v1033, %v1019
      %1035 = vadd.xlane.f32.xlu0 %v1034
      %v1036 = vpop.xlane.xlu0 %1035
      %v1037 = vrot.slane %v1036, 4
      %v1038 = vadd.f32 %v1036, %v1037
      %v1039 = vrot.slane %v1038, 2
      %v1040 = vadd.f32 %v1038, %v1039
      %v1041 = vrot.slane %v1040, 1
      %v1042 = vadd.f32 %v1040, %v1041
      %s1043 = vtos %v1042
      %v1044 = vrcp.pop 512.0
      %v1045 = vmul.f32 512.0, %v1044
      %v1046 = vsub.f32 1.0, %v1045
      %v1047 = vmul.f32 %v1044, %v1046
      %v1048 = vadd.f32 %v1044, %v1047
      %vm1049 = vweird.f32 %v1044
      %v1050 = vsel %vm1049, %v1044, %v1048
      %s1051 = vtos %v1050
      %s1052 = smul.f32 %s1043, %s1051
      %v1053 = vmul.f32 %v968, %v968
      %v1054 = vmul.f32 %v969, %v969
      %v1055 = vmul.f32 %v970, %v970
      %v1056 = vmul.f32 %v971, %v971
      %v1057 = vmul.f32 %v972, %v972
      %v1058 = vmul.f32 %v973, %v973
      %v1059 = vmul.f32 %v974, %v974
      %v1060 = vmul.f32 %v975, %v975
      %v1061 = vmul.f32 %v976, %v976
      %v1062 = vmul.f32 %v977, %v977
      %v1063 = vmul.f32 %v978, %v978
      %v1064 = vmul.f32 %v979, %v979
      %v1065 = vmul.f32 %v980, %v980
      %v1066 = vmul.f32 %v981, %v981
      %v1067 = vmul.f32 %v982, %v982
      %v1068 = vmul.f32 %v983, %v983
      %v1069 = vadd.f32 %v1053, %v1054
      %v1070 = vadd.f32 %v1069, %v1055
      %v1071 = vadd.f32 %v1070, %v1056
      %v1072 = vadd.f32 %v1071, %v1057
      %v1073 = vadd.f32 %v1072, %v1058
      %v1074 = vadd.f32 %v1073, %v1059
      %v1075 = vadd.f32 %v1074, %v1060
      %v1076 = vadd.f32 %v1075, %v1061
      %v1077 = vadd.f32 %v1076, %v1062
      %v1078 = vadd.f32 %v1077, %v1063
      %v1079 = vadd.f32 %v1078, %v1064
      %v1080 = vadd.f32 %v1079, %v1065
      %v1081 = vadd.f32 %v1080, %v1066
      %v1082 = vadd.f32 %v1081, %v1067
      %v1083 = vadd.f32 %v1082, %v1068
      %1084 = vadd.xlane.f32.xlu0 %v1083
      %v1085 = vpop.xlane.xlu0 %1084
      %v1086 = vrot.slane %v1085, 4
      %v1087 = vadd.f32 %v1085, %v1086
      %v1088 = vrot.slane %v1087, 2
      %v1089 = vadd.f32 %v1087, %v1088
      %v1090 = vrot.slane %v1089, 1
      %v1091 = vadd.f32 %v1089, %v1090
      %s1092 = vtos %v1091
      %v1093 = vrcp.pop 128.0
      %v1094 = vmul.f32 128.0, %v1093
      %v1095 = vsub.f32 1.0, %v1094
      %v1096 = vmul.f32 %v1093, %v1095
      %v1097 = vadd.f32 %v1093, %v1096
      %vm1098 = vweird.f32 %v1093
      %v1099 = vsel %vm1098, %v1093, %v1097
      %s1100 = vtos %v1099
      %s1101 = smul.f32 %s1092, %s1100
      %s1102 = sadd.f32 %s1052, %s1101
      %s1103 = smul.f32 %s1102, 60.0
      %s1104 = sadd.f32 %s1003, %s1103
      %s1105 = scalar_lea.smem [#allocation4], 0
      %1106 = sst [smem:[%s1105]] %s1104
    $region41: #{encoder_forward.1} parent=1 // pred_fallthru
      _
    %v1107 = vld [vmem:[%s0] sm:$0xff]
    %v1108 = vpack.c.bf16 %v1107, %v1107
    %v1109 = vld [vmem:[#allocation2] sm:$0xf]
    %v1110 = vld [vmem:[#allocation2 + $0x4] sm:$0xf]
    %v1111 = vld [vmem:[#allocation2 + $0x8] sm:$0xf]
    %v1112 = vld [vmem:[#allocation2 + $0xc] sm:$0xf]
    %v1113 = vld [vmem:[#allocation2 + $0x10] sm:$0xf]
    %v1114 = vld [vmem:[#allocation2 + $0x14] sm:$0xf]
    %v1115 = vld [vmem:[#allocation2 + $0x18] sm:$0xf]
    %v1116 = vld [vmem:[#allocation2 + $0x1c] sm:$0xf]
    %v1117 = vld [vmem:[#allocation2 + $0x20] sm:$0xf]
    %v1118 = vld [vmem:[#allocation2 + $0x24] sm:$0xf]
    %v1119 = vld [vmem:[#allocation2 + $0x28] sm:$0xf]
    %v1120 = vld [vmem:[#allocation2 + $0x2c] sm:$0xf]
    %v1121 = vld [vmem:[#allocation2 + $0x30] sm:$0xf]
    %v1122 = vld [vmem:[#allocation2 + $0x34] sm:$0xf]
    %v1123 = vld [vmem:[#allocation2 + $0x38] sm:$0xf]
    %v1124 = vld [vmem:[#allocation2 + $0x3c] sm:$0xf]
    %v1125 = vld [vmem:[%s4] sm:$0x1]
    %v1127 = vperm.slane %v1125, 0
    %v1145 = vunpack.c.l.b16 %v1109
    %v1146 = vunpack.c.l.b16 %v1110
    %v1147 = vunpack.c.l.b16 %v1111
    %v1148 = vunpack.c.l.b16 %v1112
    %v1149 = vunpack.c.l.b16 %v1113
    %v1150 = vunpack.c.l.b16 %v1114
    %v1151 = vunpack.c.l.b16 %v1115
    %v1152 = vunpack.c.l.b16 %v1116
    %v1153 = vunpack.c.l.b16 %v1117
    %v1154 = vunpack.c.l.b16 %v1118
    %v1155 = vunpack.c.l.b16 %v1119
    %v1156 = vunpack.c.l.b16 %v1120
    %v1157 = vunpack.c.l.b16 %v1121
    %v1158 = vunpack.c.l.b16 %v1122
    %v1159 = vunpack.c.l.b16 %v1123
    %v1160 = vunpack.c.l.b16 %v1124
    %v1161 = vpack.c.b16 %v1146, %v1145
    %v1162 = vpack.c.b16 %v1148, %v1147
    %v1163 = vpack.c.b16 %v1150, %v1149
    %v1164 = vpack.c.b16 %v1152, %v1151
    %v1165 = vpack.c.b16 %v1154, %v1153
    %v1166 = vpack.c.b16 %v1156, %v1155
    %v1167 = vpack.c.b16 %v1158, %v1157
    %v1168 = vpack.c.b16 %v1160, %v1159
    %1177 = vmatpush.bf16.msra.mxu0 %v1168
    %1178 = vmatpush.bf16.msra.mxu0 %v1167
    %1179 = vmatpush.bf16.msra.mxu0 %v1166
    %1180 = vmatpush.bf16.msra.mxu0 %v1165
    %1181 = vmatpush.bf16.msra.mxu0 %v1164
    %1182 = vmatpush.bf16.msra.mxu0 %v1163
    %1183 = vmatpush.bf16.msra.mxu0 %v1162
    %1184 = vmatpush.bf16.msra.mxu0 %v1161
    %1185 = vmatmul.bf16.gmra.mxu0 %v1108
    %v1186 = vpop.f32.mrf.mxu0
    %v1187 = vadd.f32 %v1127, %v1186
    %v1188 = vpop.f32.mrf.mxu0
    %1189 = vdwg.mxu0
    %v1190 = vxor.u32 %v1187, 2147483648
    %v1191 = vmul.f32 %v1190, 1.442695
    %v1192 = vpow.pop %v1191
    %v1193 = vadd.f32 %v1192, 1.0
    %v1194 = vrcp.pop %v1193
    %v1195 = vmul.f32 %v1193, %v1194
    %v1196 = vsub.f32 1.0, %v1195
    %v1197 = vmul.f32 %v1194, %v1196
    %v1198 = vadd.f32 %v1194, %v1197
    %vm1199 = vweird.f32 %v1193
    %vm1200 = vweird.f32 %v1194
    %vm1201 = vmor %vm1199, %vm1200
    %v1202 = vsel %vm1201, %v1194, %v1198
    %v1203 = vand.u32 2147483647, %v1193
    %vm1204 = vcmp.eq.f32.partialorder %v1203, 8.507059e+37
    %v1205 = vand.u32 %v1193, 2147483648
    %v1206 = vor.u32 1.1754944e-38, %v1205
    %v1207 = vsel %vm1204, %v1206, %v1202
    %v1208 = vmul.f32 1.0, %v1207
    %v1209 = vpack.c.bf16 %v1208, %v1208
    %v1210 = vld [vmem:[#allocation3] sm:$0xf]
    %v1211 = vld [vmem:[#allocation3 + $0x4] sm:$0xf]
    %v1212 = vld [vmem:[#allocation3 + $0x8] sm:$0xf]
    %v1213 = vld [vmem:[#allocation3 + $0xc] sm:$0xf]
    %v1214 = vld [vmem:[#allocation3 + $0x10] sm:$0xf]
    %v1215 = vld [vmem:[#allocation3 + $0x14] sm:$0xf]
    %v1216 = vld [vmem:[#allocation3 + $0x18] sm:$0xf]
    %v1217 = vld [vmem:[#allocation3 + $0x1c] sm:$0xf]
    %v1218 = vld [vmem:[#allocation3 + $0x20] sm:$0xf]
    %v1219 = vld [vmem:[#allocation3 + $0x24] sm:$0xf]
    %v1220 = vld [vmem:[#allocation3 + $0x28] sm:$0xf]
    %v1221 = vld [vmem:[#allocation3 + $0x2c] sm:$0xf]
    %v1222 = vld [vmem:[#allocation3 + $0x30] sm:$0xf]
    %v1223 = vld [vmem:[#allocation3 + $0x34] sm:$0xf]
    %v1224 = vld [vmem:[#allocation3 + $0x38] sm:$0xf]
    %v1225 = vld [vmem:[#allocation3 + $0x3c] sm:$0xf]
    %v1226 = vld [vmem:[%s8] sm:$0x1]
    %v1228 = vperm.slane %v1226, 0
    %v1246 = vunpack.c.l.b16 %v1210
    %v1247 = vunpack.c.l.b16 %v1211
    %v1248 = vunpack.c.l.b16 %v1212
    %v1249 = vunpack.c.l.b16 %v1213
    %v1250 = vunpack.c.l.b16 %v1214
    %v1251 = vunpack.c.l.b16 %v1215
    %v1252 = vunpack.c.l.b16 %v1216
    %v1253 = vunpack.c.l.b16 %v1217
    %v1254 = vunpack.c.l.b16 %v1218
    %v1255 = vunpack.c.l.b16 %v1219
    %v1256 = vunpack.c.l.b16 %v1220
    %v1257 = vunpack.c.l.b16 %v1221
    %v1258 = vunpack.c.l.b16 %v1222
    %v1259 = vunpack.c.l.b16 %v1223
    %v1260 = vunpack.c.l.b16 %v1224
    %v1261 = vunpack.c.l.b16 %v1225
    %v1262 = vpack.c.b16 %v1247, %v1246
    %v1263 = vpack.c.b16 %v1249, %v1248
    %v1264 = vpack.c.b16 %v1251, %v1250
    %v1265 = vpack.c.b16 %v1253, %v1252
    %v1266 = vpack.c.b16 %v1255, %v1254
    %v1267 = vpack.c.b16 %v1257, %v1256
    %v1268 = vpack.c.b16 %v1259, %v1258
    %v1269 = vpack.c.b16 %v1261, %v1260
    %1278 = vmatpush.bf16.msra.mxu0 %v1269
    %1279 = vmatpush.bf16.msra.mxu0 %v1268
    %1280 = vmatpush.bf16.msra.mxu0 %v1267
    %1281 = vmatpush.bf16.msra.mxu0 %v1266
    %1282 = vmatpush.bf16.msra.mxu0 %v1265
    %1283 = vmatpush.bf16.msra.mxu0 %v1264
    %1284 = vmatpush.bf16.msra.mxu0 %v1263
    %1285 = vmatpush.bf16.msra.mxu0 %v1262
    %1286 = vmatmul.bf16.gmra.mxu0 %v1209
    %v1287 = vpop.f32.mrf.mxu0
    %v1288 = vadd.f32 %v1228, %v1287
    %v1289 = vpop.f32.mrf.mxu0
    %1290 = vdwg.mxu0
    %v1291 = vxor.u32 %v1288, 2147483648
    %v1292 = vmul.f32 %v1291, 1.442695
    %v1293 = vpow.pop %v1292
    %v1294 = vadd.f32 %v1293, 1.0
    %v1295 = vrcp.pop %v1294
    %v1296 = vmul.f32 %v1294, %v1295
    %v1297 = vsub.f32 1.0, %v1296
    %v1298 = vmul.f32 %v1295, %v1297
    %v1299 = vadd.f32 %v1295, %v1298
    %vm1300 = vweird.f32 %v1294
    %vm1301 = vweird.f32 %v1295
    %vm1302 = vmor %vm1300, %vm1301
    %v1303 = vsel %vm1302, %v1295, %v1299
    %v1304 = vand.u32 2147483647, %v1294
    %vm1305 = vcmp.eq.f32.partialorder %v1304, 8.507059e+37
    %v1306 = vand.u32 %v1294, 2147483648
    %v1307 = vor.u32 1.1754944e-38, %v1306
    %v1308 = vsel %vm1305, %v1307, %v1303
    %v1309 = vmul.f32 1.0, %v1308
    %1310 = vst [vmem:[%s9] sm:$0xff] %v1309
    // Predicated region
    $region42: #{encoder_forward.1} parent=1 // pred_check
      _
    $region43: #{encoder_forward.1} parent=1 // pred_check_branch
      %1312 = sbr.rel (0) target = $region45
    $region44: #{encoder_forward.1} parent=1 // pred_region
      _
    $region45: #{encoder_forward.1} parent=1 // pred_fallthru
      _
    // Predicated region
    $region46: #{encoder_forward.1} parent=1 // pred_check
      _
    $region47: #{encoder_forward.1} parent=1 // pred_check_branch
      %1314 = sbr.rel (0) target = $region49
    $region48: #{encoder_forward.1} parent=1 // pred_region
      %1316 = vsyncadd [#allocation5], 0
      %s1318 = sshll.u32 %s10, 4
      %s1319 = int_to_ptr.hbm [resolvable:$true] %s1318
      %1321 = dma.smem_to_hbm [#allocation4], 16, %s1319, [#allocation5]
    $region49: #{encoder_forward.1} parent=1 // pred_fallthru
      _
    // Predicated region
    $region50: #{encoder_forward.1} parent=1 // pred_check
      _
    $region51: #{encoder_forward.1} parent=1 // pred_check_branch
      %1323 = sbr.rel (0) target = $region53
    $region52: #{encoder_forward.1} parent=1 // pred_region
      _
    $region53: #{encoder_forward.1} parent=1 // pred_fallthru
      _
    // Predicated region
    $region54: #{encoder_forward.1} parent=1 // pred_check
      _
    $region55: #{encoder_forward.1} parent=1 // pred_check_branch
      %1325 = sbr.rel (0) target = $region57
    $region56: #{encoder_forward.1} parent=1 // pred_region
      %1327 = dma.done [#allocation5], 16
    $region57: #{encoder_forward.1} parent=1 // pred_fallthru
      _
    %1328 = sfence
    %1329 = vsyncpa [#allocation5], 1

</llo_original>
